<compile_context>
chip_gen: v6e
topology: v6e:2x2x1
jax: 0.10.0
libtpu: 0.0.40
codegen_flags: <defaults>
</compile_context>

<pallas_src>
import functools

import jax
import jax.numpy as jnp
from jax.experimental import pallas as pl
from jax.experimental.pallas import tpu as pltpu


# --------------------------------- kernel ------------------------------------
def _capsule_routing_kernel(x_ref, w_ref, b_ref, bd_ref, out_ref, *,
                            OD, OA, num_routing):
    """One batch tile: per-capsule vote matmul + dynamic routing, all in VMEM."""
    ID, TB, IA = x_ref.shape
    ODA = OD * OA

    x = x_ref[...]                 # (ID, TB, IA)   bf16 (or f32)
    w = w_ref[...]                 # (ID, IA, ODA)  bf16 (or f32)
    bias = b_ref[...]              # (1, ODA)       f32
    ones_bd = bd_ref[...]          # (ODA, ODA)     f32 block-diagonal ones

    # ---- votes: batched per-input-capsule matmul on the MXU, f32 accumulate --
    # votes[i, b, :] = x[i, b, :] @ w[i, :, :]
    votes = jnp.einsum('ibk,iko->ibo', x, w,
                       preferred_element_type=jnp.float32)        # (ID, TB, ODA)

    # Hoisted out of the routing loop (JAX does not CSE broadcast_in_dim).
    bias_b = jnp.broadcast_to(bias, (TB, ODA))                    # (TB, ODA)

    def squash(preact):
        # per-capsule ||.||^2, replicated across the capsule's OA lanes via a
        # block-diagonal ones matmul (idle MXU; no lane reshuffles).
        norm_sq = jnp.dot(preact * preact, ones_bd,
                          preferred_element_type=jnp.float32)     # (TB, ODA)
        # squash(v) = v * ||v|| / (1 + ||v||^2): sqrt + EUP reciprocal, and a
        # zero vector maps to zero (no 0/0 NaN).
        scale = jnp.sqrt(norm_sq) * pl.reciprocal(1.0 + norm_sq, approx=True)
        return preact * scale

    # ---- routing iteration 0: logits == 0  =>  route is exactly uniform ------
    preact = jnp.sum(votes, axis=0) * jnp.float32(1.0 / OD) + bias_b
    activation = squash(preact)                                   # (TB, ODA)

    # ---- routing iterations 1 .. num_routing-1 --------------------------------
    # Logits are carried replicated across each output capsule's OA lanes, so
    # the softmax max/sum are full-128-lane reductions and route*votes needs
    # no relayout.
    logits = None
    oa_f = jnp.float32(OA)
    for _ in range(1, num_routing):
        # agreement <votes, activation> summed over output atoms and replicated
        # back across the OA lanes (block-diagonal ones matmul on the idle MXU).
        agree = jnp.einsum('ibo,op->ibp', votes * activation[None], ones_bd,
                           preferred_element_type=jnp.float32)    # (ID, TB, ODA)
        logits = agree if logits is None else logits + agree

        # softmax over output capsules: values are constant within each OA
        # group, so lane-max equals the per-capsule max and the lane-sum is
        # OA * sum over capsules.  EUP reciprocal replaces the divide.
        m = jnp.max(logits, axis=-1, keepdims=True)               # (ID, TB, 1)
        e = jnp.exp(logits - m)                                   # (ID, TB, ODA)
        denom = jnp.sum(e, axis=-1, keepdims=True)                # = OA * sum_od
        route = e * (oa_f * pl.reciprocal(denom, approx=True))    # (ID, TB, ODA)

        preact = jnp.sum(route * votes, axis=0) + bias_b          # (TB, ODA)
        activation = squash(preact)

    out_ref[...] = activation


# ------------------------------ sizing helpers --------------------------------
def _device_vmem_bytes():
    try:
        return int(pltpu.get_tpu_info().vmem_capacity_bytes)
    except Exception:
        return 64 * 1024 * 1024          # conservative default (v7x per-core)


def _choose_batch_tile(B, ID, IA, ODA, dsize, vmem_limit):
    """Largest batch tile whose *full* live set fits the VMEM budget."""
    # Big f32 routing intermediates live simultaneously per batch row:
    # votes, logits, e/route, agree  -> 4x (ID, ODA) f32 ...
    per_row = (4 * ID * ODA * 4
               + 8 * ODA * 4                 # preact/activation/norm/scale/bias
               + 2 * ID * IA * dsize         # x block (double-buffered)
               + 2 * ODA * 4)                # out block (double-buffered)
    resident = (2 * ID * IA * ODA * dsize    # weights (default double-buffered)
                + 2 * ODA * 4                # bias
                + 2 * ODA * ODA * 4)         # block-diagonal ones matrix
    budget = vmem_limit - resident - (2 << 20)
    cap = max(8, budget // max(per_row, 1))
    tile_cap = 512 if vmem_limit >= 80 * 1024 * 1024 else 256
    desired = min(B, tile_cap, int(cap))
    # keep >= 2 grid blocks when possible so v7x's two TensorCores both work.
    if B >= 16:
        half = -(-B // 2)
        desired = min(desired, ((half + 7) // 8) * 8)
    return desired


def _pick_tile(B, desired):
    """Sanitize the tile: either the full batch (single block, block dims equal
    the array dims) or a multiple of 8; prefer a divisor of B when one is close
    so the pad copy / ragged step is avoided."""
    desired = max(1, min(int(desired), B))
    if desired >= B:
        return B
    desired = max(8, (desired // 8) * 8)
    if desired >= B:
        return B
    for d in range(desired, 7, -8):      # largest mult-of-8 divisor <= desired
        if B % d == 0 and 2 * d >= desired:
            return d
    return desired                        # no close divisor: pad the batch


# --------------------------------- wrapper -----------------------------------
def capsule_layer_forward(x, weights, bias, num_routing, *,
                          batch_tile=None, vote_dtype=jnp.bfloat16):
    """CapsuleLayer forward (voting['type'] == 'standard').

    x: (B, ID, IA, 1, 1); weights: (ID, IA, OD*OA, 1, 1); bias: (OD, OA, 1, 1).
    Returns activation of shape (B, OD, OA, 1, 1) in float32.
    """
    assert num_routing >= 1, "num_routing must be >= 1"
    B, ID, IA = x.shape[:3]
    OD, OA = bias.shape[:2]
    ODA = OD * OA
    dsize = jnp.dtype(vote_dtype).itemsize

    # bf16 MXU inputs (f32 accumulation in the kernel) halve the HBM/VMEM bytes
    # of the two big operands; all routing math stays f32.
    # x is pre-transposed once host-side so the batched matmul has its batch
    # (ID) axis leading -> no per-tile relayout in the kernel.
    x2 = jnp.transpose(x.reshape(B, ID, IA), (1, 0, 2)).astype(vote_dtype)
    w2 = weights.reshape(ID, IA, ODA).astype(vote_dtype)
    b2 = bias.reshape(1, ODA).astype(jnp.float32)

    # constant block-diagonal ones matrix used for the per-capsule reductions.
    grp = jnp.arange(ODA) // OA
    ones_bd = (grp[:, None] == grp[None, :]).astype(jnp.float32)  # (ODA, ODA)

    vmem_phys = _device_vmem_bytes()
    vmem_limit = max(32 * 1024 * 1024,
                     min(int(vmem_phys * 0.75), 100 * 1024 * 1024))

    if batch_tile is None:
        batch_tile = _choose_batch_tile(B, ID, IA, ODA, dsize, vmem_limit)
    batch_tile = _pick_tile(B, batch_tile)

    n_blocks = pl.cdiv(B, batch_tile)
    Bp = n_blocks * batch_tile
    if Bp != B:  # ragged last block: pad the (transposed) batch axis.
        x2 = jnp.pad(x2, ((0, 0), (0, Bp - B), (0, 0)))

    kernel = functools.partial(_capsule_routing_kernel,
                               OD=OD, OA=OA, num_routing=num_routing)

    out_flat = pl.pallas_call(
        kernel,
        out_shape=jax.ShapeDtypeStruct((Bp, ODA), jnp.float32),
        grid_spec=pltpu.PrefetchScalarGridSpec(
            num_scalar_prefetch=0,
            grid=(n_blocks,),
            in_specs=[
                pl.BlockSpec((ID, batch_tile, IA), lambda b: (0, b, 0)),
                pl.BlockSpec((ID, IA, ODA), lambda b: (0, 0, 0)),   # resident
                pl.BlockSpec((1, ODA), lambda b: (0, 0)),           # resident
                pl.BlockSpec((ODA, ODA), lambda b: (0, 0)),         # resident
            ],
            out_specs=pl.BlockSpec((batch_tile, ODA), lambda b: (b, 0)),
        ),
        compiler_params=pltpu.CompilerParams(
            dimension_semantics=("parallel",),      # batch tiles are independent
            vmem_limit_bytes=vmem_limit,
        ),
    )(x2, w2, b2, ones_bd)

    return out_flat[:B].reshape(B, OD, OA, 1, 1)


# ---------------- pure-JAX reference (mirrors the PyTorch code) ---------------
def reference_forward(x, weights, bias, num_routing, vote_dtype=jnp.float32):
    """Mirror of CapsuleLayer.forward (type==1) + _routing + _squash.
    `vote_dtype` optionally rounds the vote operands (to match the kernel's
    bf16 MXU inputs); all other math is f32, exact softmax/divides."""
    B, ID, IA = x.shape[:3]
    OD, OA = bias.shape[:2]
    xv = x.reshape(B, ID, IA).astype(vote_dtype).astype(jnp.float32)
    wv = weights.reshape(ID, IA, OD * OA).astype(vote_dtype).astype(jnp.float32)
    bv = bias.reshape(OD, OA).astype(jnp.float32)

    # type == 1: x.unsqueeze(3).expand(...); votes = sum(x * weights, dim=2)
    votes = jnp.sum(xv[:, :, :, None] * wv[None], axis=2)          # (B, ID, OD*OA)
    votes = votes.reshape(B, ID, OD, OA)

    logits = jnp.zeros((B, ID, OD), jnp.float32)
    activation = None
    for i in range(num_routing):
        route = jax.nn.softmax(logits, axis=2)                     # (B, ID, OD)
        preact = jnp.sum(route[..., None] * votes, axis=1) + bv    # (B, OD, OA)
        norm = jnp.sqrt(jnp.sum(preact * preact, axis=2, keepdims=True))
        norm_sq = norm * norm
        activation = preact / norm * (norm_sq / (1.0 + norm_sq))   # _squash
        if i < num_routing - 1:
            distances = jnp.sum(votes * activation[:, None], axis=3)
            logits = logits + distances
    return activation.reshape(B, OD, OA, 1, 1)


if __name__ == "__main__":
    # Small shapes consistent with the module.
    B, input_dim, input_atoms = 16, 8, 32
    output_dim, output_atoms = 4, 32          # OD*OA = 128 (lane-dense)
    num_routing = 3

    key = jax.random.PRNGKey(0)
    kx, kw = jax.random.split(key)

    # parameter init matching the module: weights ~ N(0, 0.1), bias = 0.1
    weights = 0.1 * jax.random.normal(
        kw, (input_dim, input_atoms, output_dim * output_atoms, 1, 1), jnp.float32)
    bias = jnp.full((output_dim, output_atoms, 1, 1), 0.1, jnp.float32)
    x = jax.random.normal(kx, (B, input_dim, input_atoms, 1, 1), jnp.float32)

    # batch_tile=8 -> a 2-step "parallel" grid over the batch (no padding).
    out = capsule_layer_forward(x, weights, bias, num_routing, batch_tile=8)
    out = jax.block_until_ready(out)

    assert out.shape == (B, output_dim, output_atoms, 1, 1)
    assert bool(jnp.all(jnp.isfinite(out)))

    # (1) matched-precision check: reference with bf16-rounded vote operands,
    #     so the only mismatch is accumulation order + approx reciprocals.
    ref_m = reference_forward(x, weights, bias, num_routing, vote_dtype=jnp.bfloat16)
    err_m = float(jnp.max(jnp.abs(out - ref_m)))
    assert jnp.allclose(out, ref_m, atol=1e-2, rtol=1e-2), f"matched max abs err = {err_m}"

    # (2) sanity check against the exact f32 PyTorch-faithful math
    #     (looser tolerance absorbs the intentional bf16 MXU inputs).
    ref_f = reference_forward(x, weights, bias, num_routing, vote_dtype=jnp.float32)
    err_f = float(jnp.max(jnp.abs(out - ref_f)))
    assert jnp.allclose(out, ref_f, atol=3e-2, rtol=3e-2), f"f32 max abs err = {err_f}"

    print("KERNEL_OK")
</pallas_src>

<mosaic_0001>
module attributes {stable_mosaic.version = 11 : i64} {
  func.func @_capsule_routing_kernel(%arg0: i32, %arg1: memref<8x8x32xbf16, #tpu.memory_space<vmem>>, %arg2: memref<8x32x128xbf16, #tpu.memory_space<vmem>>, %arg3: memref<1x128xf32, #tpu.memory_space<vmem>>, %arg4: memref<128x128xf32, #tpu.memory_space<vmem>>, %arg5: memref<8x128xf32, #tpu.memory_space<vmem>>) attributes {dimension_semantics = [#tpu.dimension_semantics<parallel>], iteration_bounds = array<i64: 2>, scalar_prefetch = 0 : i64, scratch_operands = 0 : i64, tpu.core_type = #tpu.core_type<tc>, window_params = [{transform_indices = @transform_0, window_bounds = array<i64: 8, 8, 32>}, {pipeline_mode = #tpu.pipeline_mode<synchronous>, transform_indices = @transform_1, window_bounds = array<i64: 8, 32, 128>}, {pipeline_mode = #tpu.pipeline_mode<synchronous>, transform_indices = @transform_2, window_bounds = array<i64: 1, 128>}, {pipeline_mode = #tpu.pipeline_mode<synchronous>, transform_indices = @transform_3, window_bounds = array<i64: 128, 128>}, {transform_indices = @transform_4, window_bounds = array<i64: 8, 128>}]} {
    %c0 = arith.constant 0 : index
    %c0_0 = arith.constant 0 : index
    %c0_1 = arith.constant 0 : index
    %0 = vector.load %arg1[%c0, %c0_0, %c0_1] : memref<8x8x32xbf16, #tpu.memory_space<vmem>>, vector<8x8x32xbf16>
    %c0_2 = arith.constant 0 : index
    %c0_3 = arith.constant 0 : index
    %c0_4 = arith.constant 0 : index
    %1 = vector.load %arg2[%c0_2, %c0_3, %c0_4] : memref<8x32x128xbf16, #tpu.memory_space<vmem>>, vector<8x32x128xbf16>
    %c0_5 = arith.constant 0 : index
    %c0_6 = arith.constant 0 : index
    %2 = vector.load %arg3[%c0_5, %c0_6] : memref<1x128xf32, #tpu.memory_space<vmem>>, vector<1x128xf32>
    %c0_7 = arith.constant 0 : index
    %c0_8 = arith.constant 0 : index
    %3 = vector.load %arg4[%c0_7, %c0_8] : memref<128x128xf32, #tpu.memory_space<vmem>>, vector<128x128xf32>
    "tpu.trace_start"() <{level = 10 : i32, message = "ibk,iko->ibo"}> : () -> ()
    %cst = arith.constant dense<0.000000e+00> : vector<8x8x128xf32>
    %4 = tpu.matmul %0, %1, %cst {dimension_numbers = #tpu.dot_dimension_numbers<[2], [1], [1], [2], [0, 0, 0, 1, 1, 2], [0], [0]>} : vector<8x8x32xbf16>, vector<8x32x128xbf16>, vector<8x8x128xf32> -> vector<8x8x128xf32>
    "tpu.trace_stop"() : () -> ()
    %5 = vector.shape_cast %2 : vector<1x128xf32> to vector<1x128xf32>
    %6 = vector.broadcast %5 : vector<1x128xf32> to vector<8x128xf32>
    %cst_9 = arith.constant dense<0.000000e+00> : vector<8x128xf32>
    %7 = vector.multi_reduction <add>, %4, %cst_9 [0] : vector<8x8x128xf32> to vector<8x128xf32>
    %cst_10 = arith.constant 2.500000e-01 : f32
    %8 = vector.broadcast %cst_10 : f32 to vector<8x128xf32>
    %9 = arith.mulf %7, %8 : vector<8x128xf32>
    %10 = arith.addf %9, %6 : vector<8x128xf32>
    %11 = arith.mulf %10, %10 : vector<8x128xf32>
    %cst_11 = arith.constant dense<0.000000e+00> : vector<8x128xf32>
    %12 = tpu.matmul %11, %3, %cst_11 {dimension_numbers = #tpu.dot_dimension_numbers<[1], [0], [0], [1], [0, 0, 1, 1], [], []>} : vector<8x128xf32>, vector<128x128xf32>, vector<8x128xf32> -> vector<8x128xf32>
    %13 = math.sqrt %12 : vector<8x128xf32>
    %cst_12 = arith.constant 1.000000e+00 : f32
    %14 = vector.broadcast %cst_12 : f32 to vector<8x128xf32>
    %15 = arith.addf %14, %12 : vector<8x128xf32>
    %16 = tpu.reciprocal %15 {approx = true} : vector<8x128xf32> -> vector<8x128xf32>
    %17 = arith.mulf %13, %16 : vector<8x128xf32>
    %18 = arith.mulf %10, %17 : vector<8x128xf32>
    %19 = vector.shape_cast %18 : vector<8x128xf32> to vector<1x8x128xf32>
    %20 = vector.broadcast %19 : vector<1x8x128xf32> to vector<8x8x128xf32>
    %21 = arith.mulf %4, %20 : vector<8x8x128xf32>
    "tpu.trace_start"() <{level = 10 : i32, message = "ibo,op->ibp"}> : () -> ()
    %cst_13 = arith.constant dense<0.000000e+00> : vector<8x8x128xf32>
    %22 = tpu.matmul %21, %3, %cst_13 {dimension_numbers = #tpu.dot_dimension_numbers<[2], [0], [0, 1], [1], [0, 0, 0, 1, 1, 1], [], []>} : vector<8x8x128xf32>, vector<128x128xf32>, vector<8x8x128xf32> -> vector<8x8x128xf32>
    "tpu.trace_stop"() : () -> ()
    %cst_14 = arith.constant dense<0xFF800000> : vector<8x8xf32>
    %23 = vector.multi_reduction <maximumf>, %22, %cst_14 [2] : vector<8x8x128xf32> to vector<8x8xf32>
    %24 = vector.shape_cast %23 : vector<8x8xf32> to vector<8x8x1xf32>
    %25 = vector.broadcast %24 : vector<8x8x1xf32> to vector<8x8x128xf32>
    %26 = arith.subf %22, %25 : vector<8x8x128xf32>
    %27 = math.exp %26 : vector<8x8x128xf32>
    %cst_15 = arith.constant dense<0.000000e+00> : vector<8x8xf32>
    %28 = vector.multi_reduction <add>, %27, %cst_15 [2] : vector<8x8x128xf32> to vector<8x8xf32>
    %29 = vector.shape_cast %28 : vector<8x8xf32> to vector<8x8x1xf32>
    %30 = tpu.reciprocal %29 {approx = true} : vector<8x8x1xf32> -> vector<8x8x1xf32>
    %cst_16 = arith.constant 3.200000e+01 : f32
    %31 = vector.broadcast %cst_16 : f32 to vector<8x8x1xf32>
    %32 = arith.mulf %31, %30 : vector<8x8x1xf32>
    %33 = vector.broadcast %32 : vector<8x8x1xf32> to vector<8x8x128xf32>
    %34 = arith.mulf %27, %33 : vector<8x8x128xf32>
    %35 = arith.mulf %34, %4 : vector<8x8x128xf32>
    %cst_17 = arith.constant dense<0.000000e+00> : vector<8x128xf32>
    %36 = vector.multi_reduction <add>, %35, %cst_17 [0] : vector<8x8x128xf32> to vector<8x128xf32>
    %37 = arith.addf %36, %6 : vector<8x128xf32>
    %38 = arith.mulf %37, %37 : vector<8x128xf32>
    %cst_18 = arith.constant dense<0.000000e+00> : vector<8x128xf32>
    %39 = tpu.matmul %38, %3, %cst_18 {dimension_numbers = #tpu.dot_dimension_numbers<[1], [0], [0], [1], [0, 0, 1, 1], [], []>} : vector<8x128xf32>, vector<128x128xf32>, vector<8x128xf32> -> vector<8x128xf32>
    %40 = math.sqrt %39 : vector<8x128xf32>
    %cst_19 = arith.constant 1.000000e+00 : f32
    %41 = vector.broadcast %cst_19 : f32 to vector<8x128xf32>
    %42 = arith.addf %41, %39 : vector<8x128xf32>
    %43 = tpu.reciprocal %42 {approx = true} : vector<8x128xf32> -> vector<8x128xf32>
    %44 = arith.mulf %40, %43 : vector<8x128xf32>
    %45 = arith.mulf %37, %44 : vector<8x128xf32>
    %46 = vector.shape_cast %45 : vector<8x128xf32> to vector<1x8x128xf32>
    %47 = vector.broadcast %46 : vector<1x8x128xf32> to vector<8x8x128xf32>
    %48 = arith.mulf %4, %47 : vector<8x8x128xf32>
    "tpu.trace_start"() <{level = 10 : i32, message = "ibo,op->ibp"}> : () -> ()
    %cst_20 = arith.constant dense<0.000000e+00> : vector<8x8x128xf32>
    %49 = tpu.matmul %48, %3, %cst_20 {dimension_numbers = #tpu.dot_dimension_numbers<[2], [0], [0, 1], [1], [0, 0, 0, 1, 1, 1], [], []>} : vector<8x8x128xf32>, vector<128x128xf32>, vector<8x8x128xf32> -> vector<8x8x128xf32>
    "tpu.trace_stop"() : () -> ()
    %50 = arith.addf %22, %49 : vector<8x8x128xf32>
    %cst_21 = arith.constant dense<0xFF800000> : vector<8x8xf32>
    %51 = vector.multi_reduction <maximumf>, %50, %cst_21 [2] : vector<8x8x128xf32> to vector<8x8xf32>
    %52 = vector.shape_cast %51 : vector<8x8xf32> to vector<8x8x1xf32>
    %53 = vector.broadcast %52 : vector<8x8x1xf32> to vector<8x8x128xf32>
    %54 = arith.subf %50, %53 : vector<8x8x128xf32>
    %55 = math.exp %54 : vector<8x8x128xf32>
    %cst_22 = arith.constant dense<0.000000e+00> : vector<8x8xf32>
    %56 = vector.multi_reduction <add>, %55, %cst_22 [2] : vector<8x8x128xf32> to vector<8x8xf32>
    %57 = vector.shape_cast %56 : vector<8x8xf32> to vector<8x8x1xf32>
    %58 = tpu.reciprocal %57 {approx = true} : vector<8x8x1xf32> -> vector<8x8x1xf32>
    %cst_23 = arith.constant 3.200000e+01 : f32
    %59 = vector.broadcast %cst_23 : f32 to vector<8x8x1xf32>
    %60 = arith.mulf %59, %58 : vector<8x8x1xf32>
    %61 = vector.broadcast %60 : vector<8x8x1xf32> to vector<8x8x128xf32>
    %62 = arith.mulf %55, %61 : vector<8x8x128xf32>
    %63 = arith.mulf %62, %4 : vector<8x8x128xf32>
    %cst_24 = arith.constant dense<0.000000e+00> : vector<8x128xf32>
    %64 = vector.multi_reduction <add>, %63, %cst_24 [0] : vector<8x8x128xf32> to vector<8x128xf32>
    %65 = arith.addf %64, %6 : vector<8x128xf32>
    %66 = arith.mulf %65, %65 : vector<8x128xf32>
    %cst_25 = arith.constant dense<0.000000e+00> : vector<8x128xf32>
    %67 = tpu.matmul %66, %3, %cst_25 {dimension_numbers = #tpu.dot_dimension_numbers<[1], [0], [0], [1], [0, 0, 1, 1], [], []>} : vector<8x128xf32>, vector<128x128xf32>, vector<8x128xf32> -> vector<8x128xf32>
    %68 = math.sqrt %67 : vector<8x128xf32>
    %cst_26 = arith.constant 1.000000e+00 : f32
    %69 = vector.broadcast %cst_26 : f32 to vector<8x128xf32>
    %70 = arith.addf %69, %67 : vector<8x128xf32>
    %71 = tpu.reciprocal %70 {approx = true} : vector<8x128xf32> -> vector<8x128xf32>
    %72 = arith.mulf %68, %71 : vector<8x128xf32>
    %73 = arith.mulf %65, %72 : vector<8x128xf32>
    %c0_27 = arith.constant 0 : index
    %c0_28 = arith.constant 0 : index
    %74 = vector.load %arg5[%c0_27, %c0_28] : memref<8x128xf32, #tpu.memory_space<vmem>>, vector<8x128xf32>
    tpu.vector_store %arg5[%c0_27, %c0_28], %73 {strides = array<i32>} : memref<8x128xf32, #tpu.memory_space<vmem>>, vector<8x128xf32>,
    return
  }
  func.func @transform_0(%arg0: i32) -> (i32, i32, i32) {
    %c0_i32 = arith.constant 0 : i32
    %c0_i32_0 = arith.constant 0 : i32
    %c0_i32_1 = arith.constant 0 : i32
    return %c0_i32, %arg0, %c0_i32_0 : i32, i32, i32
  }
  func.func @transform_1(%arg0: i32) -> (i32, i32, i32) {
    %c0_i32 = arith.constant 0 : i32
    %c0_i32_0 = arith.constant 0 : i32
    %c0_i32_1 = arith.constant 0 : i32
    %c0_i32_2 = arith.constant 0 : i32
    return %c0_i32, %c0_i32_0, %c0_i32_1 : i32, i32, i32
  }
  func.func @transform_2(%arg0: i32) -> (i32, i32) {
    %c0_i32 = arith.constant 0 : i32
    %c0_i32_0 = arith.constant 0 : i32
    %c0_i32_1 = arith.constant 0 : i32
    return %c0_i32, %c0_i32_0 : i32, i32
  }
  func.func @transform_3(%arg0: i32) -> (i32, i32) {
    %c0_i32 = arith.constant 0 : i32
    %c0_i32_0 = arith.constant 0 : i32
    %c0_i32_1 = arith.constant 0 : i32
    return %c0_i32, %c0_i32_0 : i32, i32
  }
  func.func @transform_4(%arg0: i32) -> (i32, i32) {
    %c0_i32 = arith.constant 0 : i32
    %c0_i32_0 = arith.constant 0 : i32
    return %arg0, %c0_i32 : i32, i32
  }
}

</mosaic_0001>

<llo_original>
// kernel: tpu_custom_call.1
$region0: #{tpu_custom_call.1}
  #allocation0 [shape = 'u32[]', space=smem, size = 0x4, offset = 0x4, fixed_abs, tag = 'smem constant byte address 0x4 - core index']
  #allocation1 [shape = 'u32[144,128]{1,0:T(1,128)}', space=vmem, size = 0x12000, scoped, tag = 'internal scratch']
  %s0 = inlined_call_operand.hbm [shape: bf16[8,16,32], index: 0, kind: input, shape index: {}]
  %s1 = inlined_call_operand.hbm [shape: bf16[8,32,128], index: 1, kind: input, shape index: {}]
  %s2 = inlined_call_operand.vmem [shape: f32[1,128], index: 2, kind: input, shape index: {}]
  %s3 = inlined_call_operand.hbm [shape: f32[128,128], index: 3, kind: input, shape index: {}]
  %s4 = inlined_call_operand.hbm [shape: f32[16,128], index: 4, kind: output, shape index: {}]
  %s5 = sld [smem:[#allocation0]]
  $region61: #{tpu_custom_call.1} parent=0
    _
  %s7 = ssub.s32 1, %s5
  %s8 = scalar_select 0, %s7, %s5
  $region1: #{tpu_custom_call.1} parent=0
    #allocation2 [shape = 'u8[32768]{0}', space=vmem, size = 0x8000, scoped, tag = 'input window, operand 0']
    #allocation3 [shape = 's32[2]{0}', space=sflag, size = 0x8, scoped, tag = 'scoped memory for tpu_custom_call.1']
    #allocation4 [shape = 's32[2]{0}', space=sflag, size = 0x8, scoped, tag = 'scoped memory for tpu_custom_call.1']
    #allocation5 [shape = 'u8[65536]{0}', space=vmem, size = 0x10000, scoped, tag = 'input window, operand 1, single buffered']
    #allocation6 [shape = 's32[1]{0}', space=sflag, size = 0x4, scoped, tag = 'scoped memory for tpu_custom_call.1']
    #allocation7 [shape = 'u8[65536]{0}', space=vmem, size = 0x10000, scoped, tag = 'input window, operand 3, single buffered']
    #allocation8 [shape = 'u8[8192]{0}', space=vmem, size = 0x2000, scoped, tag = 'output window, operand 0']
    %9 = vsyncpa [#allocation3], 0
    %s10 = scalar_lea.sflag [#allocation3], 1
    %11 = vsyncpa %s10, 0
    %12 = vsyncpa [#allocation6], 0
    %13 = vsyncpa [#allocation4], 0
    %s14 = scalar_lea.sflag [#allocation4], 1
    %15 = vsyncpa %s14, 0
    loop: start=0, step=1, limit=4
    $region2: #{tpu_custom_call.1} parent=1 // loop_pre_header
      _
    $region3: #{tpu_custom_call.1} parent=1 // loop_header
      %s17 = sphi 0, %s21
      %p18 = scmp.ge.s32.totalorder %s17, 4
      %s27 = sphi 0, %s29
      %s30 = sphi 0, %s27
      %s31 = sphi 0, %s30
      %s47 = sphi 0, %s31
      %s51 = sphi 0, %s51
      %s53 = sphi 0, %s51
      %s54 = sphi 0, %s53
      %s68 = sphi 0, %s54
      %s72 = sphi 0, %s72
      %s74 = sphi 0, %s72
      %s75 = sphi 0, %s74
      %s89 = sphi 0, %s75
      %s93 = sphi 0, %s93
      %s95 = sphi 0, %s93
      %s96 = sphi 0, %s95
      %s110 = sphi 0, %s96
      %s116 = sphi 0, %s118
      %s119 = sphi 0, %s116
      %s120 = sphi 0, %s119
      %s136 = sphi 0, %s120
    $region4: #{tpu_custom_call.1} parent=1 // loop_header_branch
      %20 = sbr.rel (%p18) target = $region8
    $region5: #{tpu_custom_call.1} parent=1 // loop_body
      %s22 = ssub.s32 %s17, 1
      %s23 = ssub.s32 %s17, 2
      %s24 = sadd.s32 %s17, 1
      %s25 = ssub.s32 %s17, %s24
      %p26 = scmp.eq.s32.totalorder %s25, 0
      %s28 = sadd.s32 %s27, 1
      %s29 = scalar_select %p26, %s27, %s28
      %p32 = pneg %p26
      %p33 = scmp.eq.s32.totalorder %s17, 1
      %p34 = por %p32, %p33
      %p35 = scmp.ne.s32.totalorder %s27, %s30
      %p36 = scmp.eq.s32.totalorder %s17, 0
      %p37 = por %p35, %p36
      %p38 = scmp.ne.s32.totalorder %s27, %s30
      %p39 = scmp.eq.s32.totalorder %s22, 1
      %p40 = por %p38, %p39
      %p41 = scmp.ne.s32.totalorder %s30, %s31
      %p42 = scmp.eq.s32.totalorder %s22, 0
      %p43 = por %p41, %p42
      %p44 = scmp.ne.s32.totalorder %s30, %s31
      %p45 = scmp.eq.s32.totalorder %s23, 1
      %p46 = por %p44, %p45
      %p48 = scmp.ne.s32.totalorder %s31, %s47
      %p49 = scmp.eq.s32.totalorder %s23, 0
      %p50 = por %p48, %p49
      %s52 = sadd.s32 %s51, 1
      %p55 = scmp.eq.s32.totalorder %s17, 1
      %p56 = scmp.ne.s32.totalorder %s51, %s53
      %p57 = scmp.eq.s32.totalorder %s17, 0
      %p58 = por %p56, %p57
      %p59 = scmp.ne.s32.totalorder %s51, %s53
      %p60 = scmp.eq.s32.totalorder %s22, 1
      %p61 = por %p59, %p60
      %p62 = scmp.ne.s32.totalorder %s53, %s54
      %p63 = scmp.eq.s32.totalorder %s22, 0
      %p64 = por %p62, %p63
      %p65 = scmp.ne.s32.totalorder %s53, %s54
      %p66 = scmp.eq.s32.totalorder %s23, 1
      %p67 = por %p65, %p66
      %p69 = scmp.ne.s32.totalorder %s54, %s68
      %p70 = scmp.eq.s32.totalorder %s23, 0
      %p71 = por %p69, %p70
      %s73 = sadd.s32 %s72, 1
      %p76 = scmp.eq.s32.totalorder %s17, 1
      %p77 = scmp.ne.s32.totalorder %s72, %s74
      %p78 = scmp.eq.s32.totalorder %s17, 0
      %p79 = por %p77, %p78
      %p80 = scmp.ne.s32.totalorder %s72, %s74
      %p81 = scmp.eq.s32.totalorder %s22, 1
      %p82 = por %p80, %p81
      %p83 = scmp.ne.s32.totalorder %s74, %s75
      %p84 = scmp.eq.s32.totalorder %s22, 0
      %p85 = por %p83, %p84
      %p86 = scmp.ne.s32.totalorder %s74, %s75
      %p87 = scmp.eq.s32.totalorder %s23, 1
      %p88 = por %p86, %p87
      %p90 = scmp.ne.s32.totalorder %s75, %s89
      %p91 = scmp.eq.s32.totalorder %s23, 0
      %p92 = por %p90, %p91
      %s94 = sadd.s32 %s93, 1
      %p97 = scmp.eq.s32.totalorder %s17, 1
      %p98 = scmp.ne.s32.totalorder %s93, %s95
      %p99 = scmp.eq.s32.totalorder %s17, 0
      %p100 = por %p98, %p99
      %p101 = scmp.ne.s32.totalorder %s93, %s95
      %p102 = scmp.eq.s32.totalorder %s22, 1
      %p103 = por %p101, %p102
      %p104 = scmp.ne.s32.totalorder %s95, %s96
      %p105 = scmp.eq.s32.totalorder %s22, 0
      %p106 = por %p104, %p105
      %p107 = scmp.ne.s32.totalorder %s95, %s96
      %p108 = scmp.eq.s32.totalorder %s23, 1
      %p109 = por %p107, %p108
      %p111 = scmp.ne.s32.totalorder %s96, %s110
      %p112 = scmp.eq.s32.totalorder %s23, 0
      %p113 = por %p111, %p112
      %s114 = ssub.s32 %s17, %s24
      %p115 = scmp.eq.s32.totalorder %s114, 0
      %s117 = sadd.s32 %s116, 1
      %s118 = scalar_select %p115, %s116, %s117
      %p121 = pneg %p115
      %p122 = scmp.eq.s32.totalorder %s17, 1
      %p123 = por %p121, %p122
      %p124 = scmp.ne.s32.totalorder %s116, %s119
      %p125 = scmp.eq.s32.totalorder %s17, 0
      %p126 = por %p124, %p125
      %p127 = scmp.ne.s32.totalorder %s116, %s119
      %p128 = scmp.eq.s32.totalorder %s22, 1
      %p129 = por %p127, %p128
      %p130 = scmp.ne.s32.totalorder %s119, %s120
      %p131 = scmp.eq.s32.totalorder %s22, 0
      %p132 = por %p130, %p131
      %p133 = scmp.ne.s32.totalorder %s119, %s120
      %p134 = scmp.eq.s32.totalorder %s23, 1
      %p135 = por %p133, %p134
      %p137 = scmp.ne.s32.totalorder %s120, %s136
      %p138 = scmp.eq.s32.totalorder %s23, 0
      %p139 = por %p137, %p138
      %p140 = scmp.le.s32.totalorder 1, %s17
      %p141 = scmp.lt.s32.totalorder %s17, 3
      %p142 = pnand %p140, %p141
      %p143 = pneg %p142
      // Predicated region
      $region9: #{tpu_custom_call.1} parent=5 // pred_check
        _
      $region10: #{tpu_custom_call.1} parent=5 // pred_check_branch
        %145 = sbr.rel (%p142) target = $region12
      $region11: #{tpu_custom_call.1} parent=5 // pred_region
        %s146 = ssub.s32 %s17, 1
        // Predicated region
        $region13: #{tpu_custom_call.1} parent=11 // pred_check
          %p147 = pneg %p64
        $region14: #{tpu_custom_call.1} parent=11 // pred_check_branch
          %149 = sbr.rel (%p147) target = $region16
        $region15: #{tpu_custom_call.1} parent=11 // pred_region
          %s151 = ssub.s32 2048, 2048
          %152 = vsyncadd [#allocation6], %s151
          %s153 = sshll.u32 [#allocation5], 4
          %s154 = int_to_ptr.vmem [resolvable:$true] %s153
          %159 = dma.hbm_to_vmem [thread:$0]  %s1, 2048, %s154, [#allocation6], 64, 64, 4
        $region16: #{tpu_custom_call.1} parent=11 // pred_fallthru
          _
        // Predicated region
        $region17: #{tpu_custom_call.1} parent=11 // pred_check
          %p160 = pneg %p85
        $region18: #{tpu_custom_call.1} parent=11 // pred_check_branch
          %162 = sbr.rel (%p160) target = $region20
        $region19: #{tpu_custom_call.1} parent=11 // pred_region
          _
        $region20: #{tpu_custom_call.1} parent=11 // pred_fallthru
          _
        // Predicated region
        $region21: #{tpu_custom_call.1} parent=11 // pred_check
          %p163 = pneg %p106
        $region22: #{tpu_custom_call.1} parent=11 // pred_check_branch
          %165 = sbr.rel (%p163) target = $region24
        $region23: #{tpu_custom_call.1} parent=11 // pred_region
          %s167 = ssub.s32 2048, 2048
          %168 = vsyncadd [#allocation6], %s167
          %s169 = sshll.u32 [#allocation7], 4
          %s170 = int_to_ptr.vmem [resolvable:$true] %s169
          %175 = dma.hbm_to_vmem [thread:$0]  %s3, 2048, %s170, [#allocation6], 128, 128, 8
        $region24: #{tpu_custom_call.1} parent=11 // pred_fallthru
          _
      $region12: #{tpu_custom_call.1} parent=5 // pred_fallthru
        _
      %p176 = scmp.lt.s32.totalorder %s17, 2
      // Predicated region
      $region25: #{tpu_custom_call.1} parent=5 // pred_check
        %p177 = pneg %p176
      $region26: #{tpu_custom_call.1} parent=5 // pred_check_branch
        %179 = sbr.rel (%p177) target = $region28
      $region27: #{tpu_custom_call.1} parent=5 // pred_region
        // Predicated region
        $region29: #{tpu_custom_call.1} parent=27 // pred_check
          %p180 = pneg %p37
        $region30: #{tpu_custom_call.1} parent=27 // pred_check_branch
          %182 = sbr.rel (%p180) target = $region32
        $region31: #{tpu_custom_call.1} parent=27 // pred_region
          %s183 = sand.u32 %s27, 1
          %s184 = scalar_lea.sflag [#allocation3], %s183
          %s185 = sand.u32 %s27, 1
          %s186 = smul.addr %s185, 32
          %s187 = scalar_lea.vmem [#allocation2], %s186
          %s189 = ssub.s32 512, 512
          %190 = vsyncadd %s184, %s189
          %s191 = smul.addr %s17, 64
          %s192 = scalar_lea.hbm %s0, %s191
          %s193 = sshll.u32 %s187, 4
          %s194 = int_to_ptr.vmem [resolvable:$true] %s193
          %199 = dma.hbm_to_vmem [thread:$0]  %s192, 512, %s194, %s184, 128, 64, 4
        $region32: #{tpu_custom_call.1} parent=27 // pred_fallthru
          _
      $region28: #{tpu_custom_call.1} parent=5 // pred_fallthru
        _
      %p200 = scmp.le.s32.totalorder 1, %s17
      %p201 = scmp.lt.s32.totalorder %s17, 3
      %p202 = pnand %p200, %p201
      %p203 = pneg %p202
      // Predicated region
      $region33: #{tpu_custom_call.1} parent=5 // pred_check
        _
      $region34: #{tpu_custom_call.1} parent=5 // pred_check_branch
        %205 = sbr.rel (%p202) target = $region36
      $region35: #{tpu_custom_call.1} parent=5 // pred_region
        %s206 = ssub.s32 %s17, 1
        %s207 = sand.u32 %s30, 1
        %s208 = scalar_lea.sflag [#allocation3], %s207
        %s209 = sand.u32 %s30, 1
        %s210 = smul.addr %s209, 32
        %s211 = scalar_lea.vmem [#allocation2], %s210
        // Predicated region
        $region37: #{tpu_custom_call.1} parent=35 // pred_check
          %p212 = pneg %p43
        $region38: #{tpu_custom_call.1} parent=35 // pred_check_branch
          %214 = sbr.rel (%p212) target = $region40
        $region39: #{tpu_custom_call.1} parent=35 // pred_region
          %215 = dma.done %s208, 512
        $region40: #{tpu_custom_call.1} parent=35 // pred_fallthru
          _
        // Predicated region
        $region41: #{tpu_custom_call.1} parent=35 // pred_check
          %p216 = pneg %p64
        $region42: #{tpu_custom_call.1} parent=35 // pred_check_branch
          %218 = sbr.rel (%p216) target = $region44
        $region43: #{tpu_custom_call.1} parent=35 // pred_region
          %219 = dma.done [#allocation6], 2048
        $region44: #{tpu_custom_call.1} parent=35 // pred_fallthru
          _
        // Predicated region
        $region45: #{tpu_custom_call.1} parent=35 // pred_check
          %p220 = pneg %p106
        $region46: #{tpu_custom_call.1} parent=35 // pred_check_branch
          %222 = sbr.rel (%p220) target = $region48
        $region47: #{tpu_custom_call.1} parent=35 // pred_region
          %223 = dma.done [#allocation6], 2048
        $region48: #{tpu_custom_call.1} parent=35 // pred_fallthru
          _
        %s224 = sand.u32 %s30, 1
        %s225 = scalar_lea.sflag [#allocation3], %s224
        %s226 = sand.u32 %s30, 1
        %s227 = smul.addr %s226, 32
        %s228 = scalar_lea.vmem [#allocation2], %s227
        %p229 = pneg %p43
        %p230 = pneg %p40
        %p231 = pneg %p64
        %p232 = pneg %p61
        %p233 = pneg %p85
        %p234 = pneg %p82
        %p235 = pneg %p106
        %p236 = pneg %p103
        %p237 = pneg %p132
        %p238 = pneg %p129
        %s239 = sand.u32 %s119, 1
        %s240 = scalar_lea.sflag [#allocation4], %s239
        %s241 = sand.u32 %s119, 1
        %s242 = smul.addr %s241, 8
        %s243 = scalar_lea.vmem [#allocation8], %s242
        %v245 = vld [vmem:[%s211] sm:$0xf]
        %v246 = vld [vmem:[%s211 + $0x4] sm:$0xf]
        %v247 = vld [vmem:[%s211 + $0x8] sm:$0xf]
        %v248 = vld [vmem:[%s211 + $0xc] sm:$0xf]
        %v249 = vld [vmem:[%s211 + $0x10] sm:$0xf]
        %v250 = vld [vmem:[%s211 + $0x14] sm:$0xf]
        %v251 = vld [vmem:[%s211 + $0x18] sm:$0xf]
        %v252 = vld [vmem:[%s211 + $0x1c] sm:$0xf]
        %v253 = vld [vmem:[#allocation5] sm:$0xf]
        %v254 = vld [vmem:[#allocation5 + $0x4] sm:$0xf]
        %v255 = vld [vmem:[#allocation5 + $0x8] sm:$0xf]
        %v256 = vld [vmem:[#allocation5 + $0xc] sm:$0xf]
        %v257 = vld [vmem:[#allocation5 + $0x10] sm:$0xf]
        %v258 = vld [vmem:[#allocation5 + $0x14] sm:$0xf]
        %v259 = vld [vmem:[#allocation5 + $0x18] sm:$0xf]
        %v260 = vld [vmem:[#allocation5 + $0x1c] sm:$0xf]
        %v261 = vld [vmem:[#allocation5 + $0x20] sm:$0xf]
        %v262 = vld [vmem:[#allocation5 + $0x24] sm:$0xf]
        %v263 = vld [vmem:[#allocation5 + $0x28] sm:$0xf]
        %v264 = vld [vmem:[#allocation5 + $0x2c] sm:$0xf]
        %v265 = vld [vmem:[#allocation5 + $0x30] sm:$0xf]
        %v266 = vld [vmem:[#allocation5 + $0x34] sm:$0xf]
        %v267 = vld [vmem:[#allocation5 + $0x38] sm:$0xf]
        %v268 = vld [vmem:[#allocation5 + $0x3c] sm:$0xf]
        %v269 = vld [vmem:[#allocation5 + $0x40] sm:$0xf]
        %v270 = vld [vmem:[#allocation5 + $0x44] sm:$0xf]
        %v271 = vld [vmem:[#allocation5 + $0x48] sm:$0xf]
        %v272 = vld [vmem:[#allocation5 + $0x4c] sm:$0xf]
        %v273 = vld [vmem:[#allocation5 + $0x50] sm:$0xf]
        %v274 = vld [vmem:[#allocation5 + $0x54] sm:$0xf]
        %v275 = vld [vmem:[#allocation5 + $0x58] sm:$0xf]
        %v276 = vld [vmem:[#allocation5 + $0x5c] sm:$0xf]
        %v277 = vld [vmem:[#allocation5 + $0x60] sm:$0xf]
        %v278 = vld [vmem:[#allocation5 + $0x64] sm:$0xf]
        %v279 = vld [vmem:[#allocation5 + $0x68] sm:$0xf]
        %v280 = vld [vmem:[#allocation5 + $0x6c] sm:$0xf]
        %v281 = vld [vmem:[#allocation5 + $0x70] sm:$0xf]
        %v282 = vld [vmem:[#allocation5 + $0x74] sm:$0xf]
        %v283 = vld [vmem:[#allocation5 + $0x78] sm:$0xf]
        %v284 = vld [vmem:[#allocation5 + $0x7c] sm:$0xf]
        %v285 = vld [vmem:[%s2] sm:$0x1]
        %v286 = vld [vmem:[#allocation7] sm:$0xff]
        %v287 = vld [vmem:[#allocation7 + $0x8] sm:$0xff]
        %v288 = vld [vmem:[#allocation7 + $0x10] sm:$0xff]
        %v289 = vld [vmem:[#allocation7 + $0x18] sm:$0xff]
        %v290 = vld [vmem:[#allocation7 + $0x20] sm:$0xff]
        %v291 = vld [vmem:[#allocation7 + $0x28] sm:$0xff]
        %v292 = vld [vmem:[#allocation7 + $0x30] sm:$0xff]
        %v293 = vld [vmem:[#allocation7 + $0x38] sm:$0xff]
        %v294 = vld [vmem:[#allocation7 + $0x40] sm:$0xff]
        %v295 = vld [vmem:[#allocation7 + $0x48] sm:$0xff]
        %v296 = vld [vmem:[#allocation7 + $0x50] sm:$0xff]
        %v297 = vld [vmem:[#allocation7 + $0x58] sm:$0xff]
        %v298 = vld [vmem:[#allocation7 + $0x60] sm:$0xff]
        %v299 = vld [vmem:[#allocation7 + $0x68] sm:$0xff]
        %v300 = vld [vmem:[#allocation7 + $0x70] sm:$0xff]
        %v301 = vld [vmem:[#allocation7 + $0x78] sm:$0xff]
        %v306 = vunpack.c.l.b16 %v253
        %v307 = vunpack.c.l.b16 %v254
        %v308 = vunpack.c.l.b16 %v255
        %v309 = vunpack.c.l.b16 %v256
        %v310 = vpack.c.b16 %v307, %v306
        %v311 = vpack.c.b16 %v309, %v308
        %vm314 = vcmask 261120
        %v316 = vsel %vm314, %v245, 0
        %318 = vmatprep.subr.bf16.mxu0 0
        %319 = vmatpush1.bf16.msra.mxu0 0
        %320 = vmatprep.subr.bf16.mxu0 0
        %321 = vmatpush1.bf16.msra.mxu0 0
        %322 = vmatprep.subr.bf16.mxu0 0
        %323 = vmatpush1.bf16.msra.mxu0 0
        %324 = vmatprep.subr.bf16.mxu0 0
        %325 = vmatpush1.bf16.msra.mxu0 0
        %326 = vmatprep.subr.bf16.mxu0 0
        %327 = vmatpush1.bf16.msra.mxu0 0
        %328 = vmatprep.subr.bf16.mxu0 0
        %329 = vmatpush1.bf16.msra.mxu0 0
        %330 = vmatprep.subr.bf16.mxu0 0
        %331 = vmatpush1.bf16.msra.mxu0 %v311
        %332 = vmatprep.subr.bf16.mxu0 0
        %333 = vmatpush1.bf16.msra.mxu0 %v310
        %334 = vmatprep.subr.bf16.mxu0 0
        %335 = vmatpush2.bf16.msra.mxu0 0
        %336 = vmatprep.subr.bf16.mxu0 0
        %337 = vmatpush2.bf16.msra.mxu0 0
        %338 = vmatprep.subr.bf16.mxu0 0
        %339 = vmatpush2.bf16.msra.mxu0 0
        %340 = vmatprep.subr.bf16.mxu0 0
        %341 = vmatpush2.bf16.msra.mxu0 0
        %342 = vmatprep.subr.bf16.mxu0 0
        %343 = vmatpush2.bf16.msra.mxu0 0
        %344 = vmatprep.subr.bf16.mxu0 0
        %345 = vmatpush2.bf16.msra.mxu0 0
        %346 = vmatprep.subr.bf16.mxu0 0
        %347 = vmatpush2.bf16.msra.mxu0 0
        %348 = vmatprep.subr.bf16.mxu0 0
        %349 = vmatpush2.bf16.msra.mxu0 0
        %350 = vmatprep.mubr.bf16.mxu0 0
        %351 = vmatmul.mubr.bf16.gmra.mxu0 %v316
        %v352 = vpop.f32.mrf.mxu0
        %v353 = vadd.f32 0.0, %v352
        %v354 = vpop.f32.mrf.mxu0
        %v355 = vpop.f32.mrf.mxu0
        %v356 = vpop.f32.mrf.mxu0
        %357 = vdwg.mxu0
        %v362 = vunpack.c.l.b16 %v257
        %v363 = vunpack.c.l.b16 %v258
        %v364 = vunpack.c.l.b16 %v259
        %v365 = vunpack.c.l.b16 %v260
        %v366 = vpack.c.b16 %v363, %v362
        %v367 = vpack.c.b16 %v365, %v364
        %v371 = vsel %vm314, %v246, 0
        %373 = vmatprep.subr.bf16.mxu0 0
        %374 = vmatpush1.bf16.msra.mxu0 0
        %375 = vmatprep.subr.bf16.mxu0 0
        %376 = vmatpush1.bf16.msra.mxu0 0
        %377 = vmatprep.subr.bf16.mxu0 0
        %378 = vmatpush1.bf16.msra.mxu0 0
        %379 = vmatprep.subr.bf16.mxu0 0
        %380 = vmatpush1.bf16.msra.mxu0 0
        %381 = vmatprep.subr.bf16.mxu0 0
        %382 = vmatpush1.bf16.msra.mxu0 0
        %383 = vmatprep.subr.bf16.mxu0 0
        %384 = vmatpush1.bf16.msra.mxu0 0
        %385 = vmatprep.subr.bf16.mxu0 0
        %386 = vmatpush1.bf16.msra.mxu0 %v367
        %387 = vmatprep.subr.bf16.mxu0 0
        %388 = vmatpush1.bf16.msra.mxu0 %v366
        %389 = vmatprep.subr.bf16.mxu0 0
        %390 = vmatpush2.bf16.msra.mxu0 0
        %391 = vmatprep.subr.bf16.mxu0 0
        %392 = vmatpush2.bf16.msra.mxu0 0
        %393 = vmatprep.subr.bf16.mxu0 0
        %394 = vmatpush2.bf16.msra.mxu0 0
        %395 = vmatprep.subr.bf16.mxu0 0
        %396 = vmatpush2.bf16.msra.mxu0 0
        %397 = vmatprep.subr.bf16.mxu0 0
        %398 = vmatpush2.bf16.msra.mxu0 0
        %399 = vmatprep.subr.bf16.mxu0 0
        %400 = vmatpush2.bf16.msra.mxu0 0
        %401 = vmatprep.subr.bf16.mxu0 0
        %402 = vmatpush2.bf16.msra.mxu0 0
        %403 = vmatprep.subr.bf16.mxu0 0
        %404 = vmatpush2.bf16.msra.mxu0 0
        %405 = vmatprep.mubr.bf16.mxu0 0
        %406 = vmatmul.mubr.bf16.gmra.mxu0 %v371
        %v407 = vpop.f32.mrf.mxu0
        %v408 = vadd.f32 0.0, %v407
        %v409 = vpop.f32.mrf.mxu0
        %v410 = vpop.f32.mrf.mxu0
        %v411 = vpop.f32.mrf.mxu0
        %412 = vdwg.mxu0
        %v417 = vunpack.c.l.b16 %v261
        %v418 = vunpack.c.l.b16 %v262
        %v419 = vunpack.c.l.b16 %v263
        %v420 = vunpack.c.l.b16 %v264
        %v421 = vpack.c.b16 %v418, %v417
        %v422 = vpack.c.b16 %v420, %v419
        %v426 = vsel %vm314, %v247, 0
        %428 = vmatprep.subr.bf16.mxu0 0
        %429 = vmatpush1.bf16.msra.mxu0 0
        %430 = vmatprep.subr.bf16.mxu0 0
        %431 = vmatpush1.bf16.msra.mxu0 0
        %432 = vmatprep.subr.bf16.mxu0 0
        %433 = vmatpush1.bf16.msra.mxu0 0
        %434 = vmatprep.subr.bf16.mxu0 0
        %435 = vmatpush1.bf16.msra.mxu0 0
        %436 = vmatprep.subr.bf16.mxu0 0
        %437 = vmatpush1.bf16.msra.mxu0 0
        %438 = vmatprep.subr.bf16.mxu0 0
        %439 = vmatpush1.bf16.msra.mxu0 0
        %440 = vmatprep.subr.bf16.mxu0 0
        %441 = vmatpush1.bf16.msra.mxu0 %v422
        %442 = vmatprep.subr.bf16.mxu0 0
        %443 = vmatpush1.bf16.msra.mxu0 %v421
        %444 = vmatprep.subr.bf16.mxu0 0
        %445 = vmatpush2.bf16.msra.mxu0 0
        %446 = vmatprep.subr.bf16.mxu0 0
        %447 = vmatpush2.bf16.msra.mxu0 0
        %448 = vmatprep.subr.bf16.mxu0 0
        %449 = vmatpush2.bf16.msra.mxu0 0
        %450 = vmatprep.subr.bf16.mxu0 0
        %451 = vmatpush2.bf16.msra.mxu0 0
        %452 = vmatprep.subr.bf16.mxu0 0
        %453 = vmatpush2.bf16.msra.mxu0 0
        %454 = vmatprep.subr.bf16.mxu0 0
        %455 = vmatpush2.bf16.msra.mxu0 0
        %456 = vmatprep.subr.bf16.mxu0 0
        %457 = vmatpush2.bf16.msra.mxu0 0
        %458 = vmatprep.subr.bf16.mxu0 0
        %459 = vmatpush2.bf16.msra.mxu0 0
        %460 = vmatprep.mubr.bf16.mxu0 0
        %461 = vmatmul.mubr.bf16.gmra.mxu0 %v426
        %v462 = vpop.f32.mrf.mxu0
        %v463 = vadd.f32 0.0, %v462
        %v464 = vpop.f32.mrf.mxu0
        %v465 = vpop.f32.mrf.mxu0
        %v466 = vpop.f32.mrf.mxu0
        %467 = vdwg.mxu0
        %v472 = vunpack.c.l.b16 %v265
        %v473 = vunpack.c.l.b16 %v266
        %v474 = vunpack.c.l.b16 %v267
        %v475 = vunpack.c.l.b16 %v268
        %v476 = vpack.c.b16 %v473, %v472
        %v477 = vpack.c.b16 %v475, %v474
        %v481 = vsel %vm314, %v248, 0
        %483 = vmatprep.subr.bf16.mxu0 0
        %484 = vmatpush1.bf16.msra.mxu0 0
        %485 = vmatprep.subr.bf16.mxu0 0
        %486 = vmatpush1.bf16.msra.mxu0 0
        %487 = vmatprep.subr.bf16.mxu0 0
        %488 = vmatpush1.bf16.msra.mxu0 0
        %489 = vmatprep.subr.bf16.mxu0 0
        %490 = vmatpush1.bf16.msra.mxu0 0
        %491 = vmatprep.subr.bf16.mxu0 0
        %492 = vmatpush1.bf16.msra.mxu0 0
        %493 = vmatprep.subr.bf16.mxu0 0
        %494 = vmatpush1.bf16.msra.mxu0 0
        %495 = vmatprep.subr.bf16.mxu0 0
        %496 = vmatpush1.bf16.msra.mxu0 %v477
        %497 = vmatprep.subr.bf16.mxu0 0
        %498 = vmatpush1.bf16.msra.mxu0 %v476
        %499 = vmatprep.subr.bf16.mxu0 0
        %500 = vmatpush2.bf16.msra.mxu0 0
        %501 = vmatprep.subr.bf16.mxu0 0
        %502 = vmatpush2.bf16.msra.mxu0 0
        %503 = vmatprep.subr.bf16.mxu0 0
        %504 = vmatpush2.bf16.msra.mxu0 0
        %505 = vmatprep.subr.bf16.mxu0 0
        %506 = vmatpush2.bf16.msra.mxu0 0
        %507 = vmatprep.subr.bf16.mxu0 0
        %508 = vmatpush2.bf16.msra.mxu0 0
        %509 = vmatprep.subr.bf16.mxu0 0
        %510 = vmatpush2.bf16.msra.mxu0 0
        %511 = vmatprep.subr.bf16.mxu0 0
        %512 = vmatpush2.bf16.msra.mxu0 0
        %513 = vmatprep.subr.bf16.mxu0 0
        %514 = vmatpush2.bf16.msra.mxu0 0
        %515 = vmatprep.mubr.bf16.mxu0 0
        %516 = vmatmul.mubr.bf16.gmra.mxu0 %v481
        %v517 = vpop.f32.mrf.mxu0
        %v518 = vadd.f32 0.0, %v517
        %v519 = vpop.f32.mrf.mxu0
        %v520 = vpop.f32.mrf.mxu0
        %v521 = vpop.f32.mrf.mxu0
        %522 = vdwg.mxu0
        %v527 = vunpack.c.l.b16 %v269
        %v528 = vunpack.c.l.b16 %v270
        %v529 = vunpack.c.l.b16 %v271
        %v530 = vunpack.c.l.b16 %v272
        %v531 = vpack.c.b16 %v528, %v527
        %v532 = vpack.c.b16 %v530, %v529
        %v536 = vsel %vm314, %v249, 0
        %538 = vmatprep.subr.bf16.mxu0 0
        %539 = vmatpush1.bf16.msra.mxu0 0
        %540 = vmatprep.subr.bf16.mxu0 0
        %541 = vmatpush1.bf16.msra.mxu0 0
        %542 = vmatprep.subr.bf16.mxu0 0
        %543 = vmatpush1.bf16.msra.mxu0 0
        %544 = vmatprep.subr.bf16.mxu0 0
        %545 = vmatpush1.bf16.msra.mxu0 0
        %546 = vmatprep.subr.bf16.mxu0 0
        %547 = vmatpush1.bf16.msra.mxu0 0
        %548 = vmatprep.subr.bf16.mxu0 0
        %549 = vmatpush1.bf16.msra.mxu0 0
        %550 = vmatprep.subr.bf16.mxu0 0
        %551 = vmatpush1.bf16.msra.mxu0 %v532
        %552 = vmatprep.subr.bf16.mxu0 0
        %553 = vmatpush1.bf16.msra.mxu0 %v531
        %554 = vmatprep.subr.bf16.mxu0 0
        %555 = vmatpush2.bf16.msra.mxu0 0
        %556 = vmatprep.subr.bf16.mxu0 0
        %557 = vmatpush2.bf16.msra.mxu0 0
        %558 = vmatprep.subr.bf16.mxu0 0
        %559 = vmatpush2.bf16.msra.mxu0 0
        %560 = vmatprep.subr.bf16.mxu0 0
        %561 = vmatpush2.bf16.msra.mxu0 0
        %562 = vmatprep.subr.bf16.mxu0 0
        %563 = vmatpush2.bf16.msra.mxu0 0
        %564 = vmatprep.subr.bf16.mxu0 0
        %565 = vmatpush2.bf16.msra.mxu0 0
        %566 = vmatprep.subr.bf16.mxu0 0
        %567 = vmatpush2.bf16.msra.mxu0 0
        %568 = vmatprep.subr.bf16.mxu0 0
        %569 = vmatpush2.bf16.msra.mxu0 0
        %570 = vmatprep.mubr.bf16.mxu0 0
        %571 = vmatmul.mubr.bf16.gmra.mxu0 %v536
        %v572 = vpop.f32.mrf.mxu0
        %v573 = vadd.f32 0.0, %v572
        %v574 = vpop.f32.mrf.mxu0
        %v575 = vpop.f32.mrf.mxu0
        %v576 = vpop.f32.mrf.mxu0
        %577 = vdwg.mxu0
        %v582 = vunpack.c.l.b16 %v273
        %v583 = vunpack.c.l.b16 %v274
        %v584 = vunpack.c.l.b16 %v275
        %v585 = vunpack.c.l.b16 %v276
        %v586 = vpack.c.b16 %v583, %v582
        %v587 = vpack.c.b16 %v585, %v584
        %v591 = vsel %vm314, %v250, 0
        %593 = vmatprep.subr.bf16.mxu0 0
        %594 = vmatpush1.bf16.msra.mxu0 0
        %595 = vmatprep.subr.bf16.mxu0 0
        %596 = vmatpush1.bf16.msra.mxu0 0
        %597 = vmatprep.subr.bf16.mxu0 0
        %598 = vmatpush1.bf16.msra.mxu0 0
        %599 = vmatprep.subr.bf16.mxu0 0
        %600 = vmatpush1.bf16.msra.mxu0 0
        %601 = vmatprep.subr.bf16.mxu0 0
        %602 = vmatpush1.bf16.msra.mxu0 0
        %603 = vmatprep.subr.bf16.mxu0 0
        %604 = vmatpush1.bf16.msra.mxu0 0
        %605 = vmatprep.subr.bf16.mxu0 0
        %606 = vmatpush1.bf16.msra.mxu0 %v587
        %607 = vmatprep.subr.bf16.mxu0 0
        %608 = vmatpush1.bf16.msra.mxu0 %v586
        %609 = vmatprep.subr.bf16.mxu0 0
        %610 = vmatpush2.bf16.msra.mxu0 0
        %611 = vmatprep.subr.bf16.mxu0 0
        %612 = vmatpush2.bf16.msra.mxu0 0
        %613 = vmatprep.subr.bf16.mxu0 0
        %614 = vmatpush2.bf16.msra.mxu0 0
        %615 = vmatprep.subr.bf16.mxu0 0
        %616 = vmatpush2.bf16.msra.mxu0 0
        %617 = vmatprep.subr.bf16.mxu0 0
        %618 = vmatpush2.bf16.msra.mxu0 0
        %619 = vmatprep.subr.bf16.mxu0 0
        %620 = vmatpush2.bf16.msra.mxu0 0
        %621 = vmatprep.subr.bf16.mxu0 0
        %622 = vmatpush2.bf16.msra.mxu0 0
        %623 = vmatprep.subr.bf16.mxu0 0
        %624 = vmatpush2.bf16.msra.mxu0 0
        %625 = vmatprep.mubr.bf16.mxu0 0
        %626 = vmatmul.mubr.bf16.gmra.mxu0 %v591
        %v627 = vpop.f32.mrf.mxu0
        %v628 = vadd.f32 0.0, %v627
        %v629 = vpop.f32.mrf.mxu0
        %v630 = vpop.f32.mrf.mxu0
        %v631 = vpop.f32.mrf.mxu0
        %632 = vdwg.mxu0
        %v637 = vunpack.c.l.b16 %v277
        %v638 = vunpack.c.l.b16 %v278
        %v639 = vunpack.c.l.b16 %v279
        %v640 = vunpack.c.l.b16 %v280
        %v641 = vpack.c.b16 %v638, %v637
        %v642 = vpack.c.b16 %v640, %v639
        %v646 = vsel %vm314, %v251, 0
        %648 = vmatprep.subr.bf16.mxu0 0
        %649 = vmatpush1.bf16.msra.mxu0 0
        %650 = vmatprep.subr.bf16.mxu0 0
        %651 = vmatpush1.bf16.msra.mxu0 0
        %652 = vmatprep.subr.bf16.mxu0 0
        %653 = vmatpush1.bf16.msra.mxu0 0
        %654 = vmatprep.subr.bf16.mxu0 0
        %655 = vmatpush1.bf16.msra.mxu0 0
        %656 = vmatprep.subr.bf16.mxu0 0
        %657 = vmatpush1.bf16.msra.mxu0 0
        %658 = vmatprep.subr.bf16.mxu0 0
        %659 = vmatpush1.bf16.msra.mxu0 0
        %660 = vmatprep.subr.bf16.mxu0 0
        %661 = vmatpush1.bf16.msra.mxu0 %v642
        %662 = vmatprep.subr.bf16.mxu0 0
        %663 = vmatpush1.bf16.msra.mxu0 %v641
        %664 = vmatprep.subr.bf16.mxu0 0
        %665 = vmatpush2.bf16.msra.mxu0 0
        %666 = vmatprep.subr.bf16.mxu0 0
        %667 = vmatpush2.bf16.msra.mxu0 0
        %668 = vmatprep.subr.bf16.mxu0 0
        %669 = vmatpush2.bf16.msra.mxu0 0
        %670 = vmatprep.subr.bf16.mxu0 0
        %671 = vmatpush2.bf16.msra.mxu0 0
        %672 = vmatprep.subr.bf16.mxu0 0
        %673 = vmatpush2.bf16.msra.mxu0 0
        %674 = vmatprep.subr.bf16.mxu0 0
        %675 = vmatpush2.bf16.msra.mxu0 0
        %676 = vmatprep.subr.bf16.mxu0 0
        %677 = vmatpush2.bf16.msra.mxu0 0
        %678 = vmatprep.subr.bf16.mxu0 0
        %679 = vmatpush2.bf16.msra.mxu0 0
        %680 = vmatprep.mubr.bf16.mxu0 0
        %681 = vmatmul.mubr.bf16.gmra.mxu0 %v646
        %v682 = vpop.f32.mrf.mxu0
        %v683 = vadd.f32 0.0, %v682
        %v684 = vpop.f32.mrf.mxu0
        %v685 = vpop.f32.mrf.mxu0
        %v686 = vpop.f32.mrf.mxu0
        %687 = vdwg.mxu0
        %v692 = vunpack.c.l.b16 %v281
        %v693 = vunpack.c.l.b16 %v282
        %v694 = vunpack.c.l.b16 %v283
        %v695 = vunpack.c.l.b16 %v284
        %v696 = vpack.c.b16 %v693, %v692
        %v697 = vpack.c.b16 %v695, %v694
        %v701 = vsel %vm314, %v252, 0
        %703 = vmatprep.subr.bf16.mxu0 0
        %704 = vmatpush1.bf16.msra.mxu0 0
        %705 = vmatprep.subr.bf16.mxu0 0
        %706 = vmatpush1.bf16.msra.mxu0 0
        %707 = vmatprep.subr.bf16.mxu0 0
        %708 = vmatpush1.bf16.msra.mxu0 0
        %709 = vmatprep.subr.bf16.mxu0 0
        %710 = vmatpush1.bf16.msra.mxu0 0
        %711 = vmatprep.subr.bf16.mxu0 0
        %712 = vmatpush1.bf16.msra.mxu0 0
        %713 = vmatprep.subr.bf16.mxu0 0
        %714 = vmatpush1.bf16.msra.mxu0 0
        %715 = vmatprep.subr.bf16.mxu0 0
        %716 = vmatpush1.bf16.msra.mxu0 %v697
        %717 = vmatprep.subr.bf16.mxu0 0
        %718 = vmatpush1.bf16.msra.mxu0 %v696
        %719 = vmatprep.subr.bf16.mxu0 0
        %720 = vmatpush2.bf16.msra.mxu0 0
        %721 = vmatprep.subr.bf16.mxu0 0
        %722 = vmatpush2.bf16.msra.mxu0 0
        %723 = vmatprep.subr.bf16.mxu0 0
        %724 = vmatpush2.bf16.msra.mxu0 0
        %725 = vmatprep.subr.bf16.mxu0 0
        %726 = vmatpush2.bf16.msra.mxu0 0
        %727 = vmatprep.subr.bf16.mxu0 0
        %728 = vmatpush2.bf16.msra.mxu0 0
        %729 = vmatprep.subr.bf16.mxu0 0
        %730 = vmatpush2.bf16.msra.mxu0 0
        %731 = vmatprep.subr.bf16.mxu0 0
        %732 = vmatpush2.bf16.msra.mxu0 0
        %733 = vmatprep.subr.bf16.mxu0 0
        %734 = vmatpush2.bf16.msra.mxu0 0
        %735 = vmatprep.mubr.bf16.mxu0 0
        %736 = vmatmul.mubr.bf16.gmra.mxu0 %v701
        %v737 = vpop.f32.mrf.mxu0
        %v738 = vadd.f32 0.0, %v737
        %v739 = vpop.f32.mrf.mxu0
        %v740 = vpop.f32.mrf.mxu0
        %v741 = vpop.f32.mrf.mxu0
        %742 = vdwg.mxu0
        %v744 = vlaneseq
        %v745 = vshrl.u32 %v744, 7
        %v746 = vsub.s32 0, %v745
        %v747 = vrot.slane %v285, %v746
        %v749 = vadd.f32 %v353, %v408
        %v750 = vadd.f32 %v749, %v463
        %v751 = vadd.f32 %v750, %v518
        %v752 = vadd.f32 %v751, %v573
        %v753 = vadd.f32 %v752, %v628
        %v754 = vadd.f32 %v753, %v683
        %v755 = vadd.f32 %v754, %v738
        %v756 = vmul.f32 %v755, 0.25
        %v757 = vadd.f32 %v756, %v747
        %v758 = vmul.f32 %v757, %v757
        %759 = vmatprep.subr.mxu0 0.0
        %760 = vmatpush1.msra.mxu0 %v301
        %761 = vmatprep.subr.mxu0 0.0
        %762 = vmatpush1.msra.mxu0 %v300
        %763 = vmatprep.subr.mxu0 0.0
        %764 = vmatpush1.msra.mxu0 %v299
        %765 = vmatprep.subr.mxu0 0.0
        %766 = vmatpush1.msra.mxu0 %v298
        %767 = vmatprep.subr.mxu0 0.0
        %768 = vmatpush1.msra.mxu0 %v297
        %769 = vmatprep.subr.mxu0 0.0
        %770 = vmatpush1.msra.mxu0 %v296
        %771 = vmatprep.subr.mxu0 0.0
        %772 = vmatpush1.msra.mxu0 %v295
        %773 = vmatprep.subr.mxu0 0.0
        %774 = vmatpush1.msra.mxu0 %v294
        %775 = vmatprep.subr.mxu0 0.0
        %776 = vmatpush1.msra.mxu0 %v293
        %777 = vmatprep.subr.mxu0 0.0
        %778 = vmatpush1.msra.mxu0 %v292
        %779 = vmatprep.subr.mxu0 0.0
        %780 = vmatpush1.msra.mxu0 %v291
        %781 = vmatprep.subr.mxu0 0.0
        %782 = vmatpush1.msra.mxu0 %v290
        %783 = vmatprep.subr.mxu0 0.0
        %784 = vmatpush1.msra.mxu0 %v289
        %785 = vmatprep.subr.mxu0 0.0
        %786 = vmatpush1.msra.mxu0 %v288
        %787 = vmatprep.subr.mxu0 0.0
        %788 = vmatpush1.msra.mxu0 %v287
        %789 = vmatprep.subr.mxu0 0.0
        %790 = vmatpush1.msra.mxu0 %v286
        %791 = vmatprep.subr.mxu0 0.0
        %792 = vmatpush2.msra.mxu0 0.0
        %793 = vmatprep.subr.mxu0 0.0
        %794 = vmatpush2.msra.mxu0 0.0
        %795 = vmatprep.subr.mxu0 0.0
        %796 = vmatpush2.msra.mxu0 0.0
        %797 = vmatprep.subr.mxu0 0.0
        %798 = vmatpush2.msra.mxu0 0.0
        %799 = vmatprep.subr.mxu0 0.0
        %800 = vmatpush2.msra.mxu0 0.0
        %801 = vmatprep.subr.mxu0 0.0
        %802 = vmatpush2.msra.mxu0 0.0
        %803 = vmatprep.subr.mxu0 0.0
        %804 = vmatpush2.msra.mxu0 0.0
        %805 = vmatprep.subr.mxu0 0.0
        %806 = vmatpush2.msra.mxu0 0.0
        %807 = vmatprep.subr.mxu0 0.0
        %808 = vmatpush2.msra.mxu0 0.0
        %809 = vmatprep.subr.mxu0 0.0
        %810 = vmatpush2.msra.mxu0 0.0
        %811 = vmatprep.subr.mxu0 0.0
        %812 = vmatpush2.msra.mxu0 0.0
        %813 = vmatprep.subr.mxu0 0.0
        %814 = vmatpush2.msra.mxu0 0.0
        %815 = vmatprep.subr.mxu0 0.0
        %816 = vmatpush2.msra.mxu0 0.0
        %817 = vmatprep.subr.mxu0 0.0
        %818 = vmatpush2.msra.mxu0 0.0
        %819 = vmatprep.subr.mxu0 0.0
        %820 = vmatpush2.msra.mxu0 0.0
        %821 = vmatprep.subr.mxu0 0.0
        %822 = vmatpush2.msra.mxu0 0.0
        %823 = vmatprep.mubr.f32.mxu0 0.0
        %824 = vmatmul.mubr.f32.gmra.mxu0 %v758
        %v825 = vpop.f32.mrf.mxu0
        %v826 = vadd.f32 0.0, %v825
        %v827 = vpop.f32.mrf.mxu0
        %828 = vdwg.mxu0
        %v829 = vrsqrt.pop %v826
        %v830 = vmul.f32 %v826, %v829
        %vm831 = vcmp.eq.f32.partialorder %v826, inf
        %v832 = vsel %vm831, %v826, %v830
        %vm833 = vcmp.eq.f32.partialorder %v826, 0.0
        %v834 = vand.u32 %v826, 2147483648
        %v835 = vsel %vm833, %v834, %v832
        %v836 = vadd.f32 %v826, 1.0
        %v837 = vrcp.pop %v836
        %v838 = vmul.f32 %v835, %v837
        %v839 = vmul.f32 %v757, %v838
        %v840 = vmul.f32 %v353, %v839
        %v841 = vmul.f32 %v408, %v839
        %v842 = vmul.f32 %v463, %v839
        %v843 = vmul.f32 %v518, %v839
        %v844 = vmul.f32 %v573, %v839
        %v845 = vmul.f32 %v628, %v839
        %v846 = vmul.f32 %v683, %v839
        %v847 = vmul.f32 %v738, %v839
        %848 = vmatprep.subr.mxu0 0.0
        %849 = vmatpush1.msra.mxu0 %v301
        %850 = vmatprep.subr.mxu0 0.0
        %851 = vmatpush1.msra.mxu0 %v300
        %852 = vmatprep.subr.mxu0 0.0
        %853 = vmatpush1.msra.mxu0 %v299
        %854 = vmatprep.subr.mxu0 0.0
        %855 = vmatpush1.msra.mxu0 %v298
        %856 = vmatprep.subr.mxu0 0.0
        %857 = vmatpush1.msra.mxu0 %v297
        %858 = vmatprep.subr.mxu0 0.0
        %859 = vmatpush1.msra.mxu0 %v296
        %860 = vmatprep.subr.mxu0 0.0
        %861 = vmatpush1.msra.mxu0 %v295
        %862 = vmatprep.subr.mxu0 0.0
        %863 = vmatpush1.msra.mxu0 %v294
        %864 = vmatprep.subr.mxu0 0.0
        %865 = vmatpush1.msra.mxu0 %v293
        %866 = vmatprep.subr.mxu0 0.0
        %867 = vmatpush1.msra.mxu0 %v292
        %868 = vmatprep.subr.mxu0 0.0
        %869 = vmatpush1.msra.mxu0 %v291
        %870 = vmatprep.subr.mxu0 0.0
        %871 = vmatpush1.msra.mxu0 %v290
        %872 = vmatprep.subr.mxu0 0.0
        %873 = vmatpush1.msra.mxu0 %v289
        %874 = vmatprep.subr.mxu0 0.0
        %875 = vmatpush1.msra.mxu0 %v288
        %876 = vmatprep.subr.mxu0 0.0
        %877 = vmatpush1.msra.mxu0 %v287
        %878 = vmatprep.subr.mxu0 0.0
        %879 = vmatpush1.msra.mxu0 %v286
        %880 = vmatprep.subr.mxu0 0.0
        %881 = vmatpush2.msra.mxu0 0.0
        %882 = vmatprep.subr.mxu0 0.0
        %883 = vmatpush2.msra.mxu0 0.0
        %884 = vmatprep.subr.mxu0 0.0
        %885 = vmatpush2.msra.mxu0 0.0
        %886 = vmatprep.subr.mxu0 0.0
        %887 = vmatpush2.msra.mxu0 0.0
        %888 = vmatprep.subr.mxu0 0.0
        %889 = vmatpush2.msra.mxu0 0.0
        %890 = vmatprep.subr.mxu0 0.0
        %891 = vmatpush2.msra.mxu0 0.0
        %892 = vmatprep.subr.mxu0 0.0
        %893 = vmatpush2.msra.mxu0 0.0
        %894 = vmatprep.subr.mxu0 0.0
        %895 = vmatpush2.msra.mxu0 0.0
        %896 = vmatprep.subr.mxu0 0.0
        %897 = vmatpush2.msra.mxu0 0.0
        %898 = vmatprep.subr.mxu0 0.0
        %899 = vmatpush2.msra.mxu0 0.0
        %900 = vmatprep.subr.mxu0 0.0
        %901 = vmatpush2.msra.mxu0 0.0
        %902 = vmatprep.subr.mxu0 0.0
        %903 = vmatpush2.msra.mxu0 0.0
        %904 = vmatprep.subr.mxu0 0.0
        %905 = vmatpush2.msra.mxu0 0.0
        %906 = vmatprep.subr.mxu0 0.0
        %907 = vmatpush2.msra.mxu0 0.0
        %908 = vmatprep.subr.mxu0 0.0
        %909 = vmatpush2.msra.mxu0 0.0
        %910 = vmatprep.subr.mxu0 0.0
        %911 = vmatpush2.msra.mxu0 0.0
        %912 = vmatprep.mubr.f32.mxu0 0.0
        %913 = vmatmul.mubr.f32.gmra.mxu0 %v840
        %v914 = vpop.f32.mrf.mxu0
        %v915 = vadd.f32 0.0, %v914
        %v916 = vpop.f32.mrf.mxu0
        %917 = vmatprep.mubr.f32.mxu0 0.0
        %918 = vmatmul.mubr.f32.gmra.mxu0 %v841
        %v919 = vpop.f32.mrf.mxu0
        %v920 = vadd.f32 0.0, %v919
        %v921 = vpop.f32.mrf.mxu0
        %922 = vmatprep.mubr.f32.mxu0 0.0
        %923 = vmatmul.mubr.f32.gmra.mxu0 %v842
        %v924 = vpop.f32.mrf.mxu0
        %v925 = vadd.f32 0.0, %v924
        %v926 = vpop.f32.mrf.mxu0
        %927 = vmatprep.mubr.f32.mxu0 0.0
        %928 = vmatmul.mubr.f32.gmra.mxu0 %v843
        %v929 = vpop.f32.mrf.mxu0
        %v930 = vadd.f32 0.0, %v929
        %v931 = vpop.f32.mrf.mxu0
        %932 = vmatprep.mubr.f32.mxu0 0.0
        %933 = vmatmul.mubr.f32.gmra.mxu0 %v844
        %v934 = vpop.f32.mrf.mxu0
        %v935 = vadd.f32 0.0, %v934
        %v936 = vpop.f32.mrf.mxu0
        %937 = vmatprep.mubr.f32.mxu0 0.0
        %938 = vmatmul.mubr.f32.gmra.mxu0 %v845
        %v939 = vpop.f32.mrf.mxu0
        %v940 = vadd.f32 0.0, %v939
        %v941 = vpop.f32.mrf.mxu0
        %942 = vmatprep.mubr.f32.mxu0 0.0
        %943 = vmatmul.mubr.f32.gmra.mxu0 %v846
        %v944 = vpop.f32.mrf.mxu0
        %v945 = vadd.f32 0.0, %v944
        %v946 = vpop.f32.mrf.mxu0
        %947 = vmatprep.mubr.f32.mxu0 0.0
        %948 = vmatmul.mubr.f32.gmra.mxu0 %v847
        %v949 = vpop.f32.mrf.mxu0
        %v950 = vadd.f32 0.0, %v949
        %v951 = vpop.f32.mrf.mxu0
        %952 = vdwg.mxu0
        %953 = vmax.xlane.f32.xlu0 %v915
        %v954 = vpop.xlane.xlu0 %953
        %955 = vmax.xlane.f32.xlu0 %v920
        %v956 = vpop.xlane.xlu0 %955
        %957 = vmax.xlane.f32.xlu0 %v925
        %v958 = vpop.xlane.xlu0 %957
        %959 = vmax.xlane.f32.xlu0 %v930
        %v960 = vpop.xlane.xlu0 %959
        %961 = vmax.xlane.f32.xlu0 %v935
        %v962 = vpop.xlane.xlu0 %961
        %963 = vmax.xlane.f32.xlu0 %v940
        %v964 = vpop.xlane.xlu0 %963
        %965 = vmax.xlane.f32.xlu0 %v945
        %v966 = vpop.xlane.xlu0 %965
        %967 = vmax.xlane.f32.xlu0 %v950
        %v968 = vpop.xlane.xlu0 %967
        %v969 = vsub.f32 %v915, %v954
        %v970 = vsub.f32 %v920, %v956
        %v971 = vsub.f32 %v925, %v958
        %v972 = vsub.f32 %v930, %v960
        %v973 = vsub.f32 %v935, %v962
        %v974 = vsub.f32 %v940, %v964
        %v975 = vsub.f32 %v945, %v966
        %v976 = vsub.f32 %v950, %v968
        %v977 = vmul.f32 %v969, 1.442695
        %v978 = vpow.pop %v977
        %v979 = vmul.f32 %v970, 1.442695
        %v980 = vpow.pop %v979
        %v981 = vmul.f32 %v971, 1.442695
        %v982 = vpow.pop %v981
        %v983 = vmul.f32 %v972, 1.442695
        %v984 = vpow.pop %v983
        %v985 = vmul.f32 %v973, 1.442695
        %v986 = vpow.pop %v985
        %v987 = vmul.f32 %v974, 1.442695
        %v988 = vpow.pop %v987
        %v989 = vmul.f32 %v975, 1.442695
        %v990 = vpow.pop %v989
        %v991 = vmul.f32 %v976, 1.442695
        %v992 = vpow.pop %v991
        %993 = vadd.xlane.f32.xlu0 %v978
        %v994 = vpop.xlane.xlu0 %993
        %995 = vadd.xlane.f32.xlu0 %v980
        %v996 = vpop.xlane.xlu0 %995
        %997 = vadd.xlane.f32.xlu0 %v982
        %v998 = vpop.xlane.xlu0 %997
        %999 = vadd.xlane.f32.xlu0 %v984
        %v1000 = vpop.xlane.xlu0 %999
        %1001 = vadd.xlane.f32.xlu0 %v986
        %v1002 = vpop.xlane.xlu0 %1001
        %1003 = vadd.xlane.f32.xlu0 %v988
        %v1004 = vpop.xlane.xlu0 %1003
        %1005 = vadd.xlane.f32.xlu0 %v990
        %v1006 = vpop.xlane.xlu0 %1005
        %1007 = vadd.xlane.f32.xlu0 %v992
        %v1008 = vpop.xlane.xlu0 %1007
        %v1009 = vrcp.pop %v994
        %v1010 = vrcp.pop %v996
        %v1011 = vrcp.pop %v998
        %v1012 = vrcp.pop %v1000
        %v1013 = vrcp.pop %v1002
        %v1014 = vrcp.pop %v1004
        %v1015 = vrcp.pop %v1006
        %v1016 = vrcp.pop %v1008
        %v1017 = vmul.f32 %v1009, 32.0
        %v1018 = vmul.f32 %v1010, 32.0
        %v1019 = vmul.f32 %v1011, 32.0
        %v1020 = vmul.f32 %v1012, 32.0
        %v1021 = vmul.f32 %v1013, 32.0
        %v1022 = vmul.f32 %v1014, 32.0
        %v1023 = vmul.f32 %v1015, 32.0
        %v1024 = vmul.f32 %v1016, 32.0
        %v1025 = vmul.f32 %v978, %v1017
        %v1026 = vmul.f32 %v980, %v1018
        %v1027 = vmul.f32 %v982, %v1019
        %v1028 = vmul.f32 %v984, %v1020
        %v1029 = vmul.f32 %v986, %v1021
        %v1030 = vmul.f32 %v988, %v1022
        %v1031 = vmul.f32 %v990, %v1023
        %v1032 = vmul.f32 %v992, %v1024
        %v1033 = vmul.f32 %v1025, %v353
        %v1034 = vmul.f32 %v1026, %v408
        %v1035 = vmul.f32 %v1027, %v463
        %v1036 = vmul.f32 %v1028, %v518
        %v1037 = vmul.f32 %v1029, %v573
        %v1038 = vmul.f32 %v1030, %v628
        %v1039 = vmul.f32 %v1031, %v683
        %v1040 = vmul.f32 %v1032, %v738
        %v1041 = vadd.f32 %v1033, %v1034
        %v1042 = vadd.f32 %v1041, %v1035
        %v1043 = vadd.f32 %v1042, %v1036
        %v1044 = vadd.f32 %v1043, %v1037
        %v1045 = vadd.f32 %v1044, %v1038
        %v1046 = vadd.f32 %v1045, %v1039
        %v1047 = vadd.f32 %v1046, %v1040
        %v1048 = vadd.f32 %v1047, %v747
        %v1049 = vmul.f32 %v1048, %v1048
        %1050 = vmatprep.subr.mxu0 0.0
        %1051 = vmatpush1.msra.mxu0 %v301
        %1052 = vmatprep.subr.mxu0 0.0
        %1053 = vmatpush1.msra.mxu0 %v300
        %1054 = vmatprep.subr.mxu0 0.0
        %1055 = vmatpush1.msra.mxu0 %v299
        %1056 = vmatprep.subr.mxu0 0.0
        %1057 = vmatpush1.msra.mxu0 %v298
        %1058 = vmatprep.subr.mxu0 0.0
        %1059 = vmatpush1.msra.mxu0 %v297
        %1060 = vmatprep.subr.mxu0 0.0
        %1061 = vmatpush1.msra.mxu0 %v296
        %1062 = vmatprep.subr.mxu0 0.0
        %1063 = vmatpush1.msra.mxu0 %v295
        %1064 = vmatprep.subr.mxu0 0.0
        %1065 = vmatpush1.msra.mxu0 %v294
        %1066 = vmatprep.subr.mxu0 0.0
        %1067 = vmatpush1.msra.mxu0 %v293
        %1068 = vmatprep.subr.mxu0 0.0
        %1069 = vmatpush1.msra.mxu0 %v292
        %1070 = vmatprep.subr.mxu0 0.0
        %1071 = vmatpush1.msra.mxu0 %v291
        %1072 = vmatprep.subr.mxu0 0.0
        %1073 = vmatpush1.msra.mxu0 %v290
        %1074 = vmatprep.subr.mxu0 0.0
        %1075 = vmatpush1.msra.mxu0 %v289
        %1076 = vmatprep.subr.mxu0 0.0
        %1077 = vmatpush1.msra.mxu0 %v288
        %1078 = vmatprep.subr.mxu0 0.0
        %1079 = vmatpush1.msra.mxu0 %v287
        %1080 = vmatprep.subr.mxu0 0.0
        %1081 = vmatpush1.msra.mxu0 %v286
        %1082 = vmatprep.subr.mxu0 0.0
        %1083 = vmatpush2.msra.mxu0 0.0
        %1084 = vmatprep.subr.mxu0 0.0
        %1085 = vmatpush2.msra.mxu0 0.0
        %1086 = vmatprep.subr.mxu0 0.0
        %1087 = vmatpush2.msra.mxu0 0.0
        %1088 = vmatprep.subr.mxu0 0.0
        %1089 = vmatpush2.msra.mxu0 0.0
        %1090 = vmatprep.subr.mxu0 0.0
        %1091 = vmatpush2.msra.mxu0 0.0
        %1092 = vmatprep.subr.mxu0 0.0
        %1093 = vmatpush2.msra.mxu0 0.0
        %1094 = vmatprep.subr.mxu0 0.0
        %1095 = vmatpush2.msra.mxu0 0.0
        %1096 = vmatprep.subr.mxu0 0.0
        %1097 = vmatpush2.msra.mxu0 0.0
        %1098 = vmatprep.subr.mxu0 0.0
        %1099 = vmatpush2.msra.mxu0 0.0
        %1100 = vmatprep.subr.mxu0 0.0
        %1101 = vmatpush2.msra.mxu0 0.0
        %1102 = vmatprep.subr.mxu0 0.0
        %1103 = vmatpush2.msra.mxu0 0.0
        %1104 = vmatprep.subr.mxu0 0.0
        %1105 = vmatpush2.msra.mxu0 0.0
        %1106 = vmatprep.subr.mxu0 0.0
        %1107 = vmatpush2.msra.mxu0 0.0
        %1108 = vmatprep.subr.mxu0 0.0
        %1109 = vmatpush2.msra.mxu0 0.0
        %1110 = vmatprep.subr.mxu0 0.0
        %1111 = vmatpush2.msra.mxu0 0.0
        %1112 = vmatprep.subr.mxu0 0.0
        %1113 = vmatpush2.msra.mxu0 0.0
        %1114 = vmatprep.mubr.f32.mxu0 0.0
        %1115 = vmatmul.mubr.f32.gmra.mxu0 %v1049
        %v1116 = vpop.f32.mrf.mxu0
        %v1117 = vadd.f32 0.0, %v1116
        %v1118 = vpop.f32.mrf.mxu0
        %1119 = vdwg.mxu0
        %v1120 = vrsqrt.pop %v1117
        %v1121 = vmul.f32 %v1117, %v1120
        %vm1122 = vcmp.eq.f32.partialorder %v1117, inf
        %v1123 = vsel %vm1122, %v1117, %v1121
        %vm1124 = vcmp.eq.f32.partialorder %v1117, 0.0
        %v1125 = vand.u32 %v1117, 2147483648
        %v1126 = vsel %vm1124, %v1125, %v1123
        %v1127 = vadd.f32 %v1117, 1.0
        %v1128 = vrcp.pop %v1127
        %v1129 = vmul.f32 %v1126, %v1128
        %v1130 = vmul.f32 %v1048, %v1129
        %v1131 = vmul.f32 %v353, %v1130
        %v1132 = vmul.f32 %v408, %v1130
        %v1133 = vmul.f32 %v463, %v1130
        %v1134 = vmul.f32 %v518, %v1130
        %v1135 = vmul.f32 %v573, %v1130
        %v1136 = vmul.f32 %v628, %v1130
        %v1137 = vmul.f32 %v683, %v1130
        %v1138 = vmul.f32 %v738, %v1130
        %1139 = vmatprep.subr.mxu0 0.0
        %1140 = vmatpush1.msra.mxu0 %v301
        %1141 = vmatprep.subr.mxu0 0.0
        %1142 = vmatpush1.msra.mxu0 %v300
        %1143 = vmatprep.subr.mxu0 0.0
        %1144 = vmatpush1.msra.mxu0 %v299
        %1145 = vmatprep.subr.mxu0 0.0
        %1146 = vmatpush1.msra.mxu0 %v298
        %1147 = vmatprep.subr.mxu0 0.0
        %1148 = vmatpush1.msra.mxu0 %v297
        %1149 = vmatprep.subr.mxu0 0.0
        %1150 = vmatpush1.msra.mxu0 %v296
        %1151 = vmatprep.subr.mxu0 0.0
        %1152 = vmatpush1.msra.mxu0 %v295
        %1153 = vmatprep.subr.mxu0 0.0
        %1154 = vmatpush1.msra.mxu0 %v294
        %1155 = vmatprep.subr.mxu0 0.0
        %1156 = vmatpush1.msra.mxu0 %v293
        %1157 = vmatprep.subr.mxu0 0.0
        %1158 = vmatpush1.msra.mxu0 %v292
        %1159 = vmatprep.subr.mxu0 0.0
        %1160 = vmatpush1.msra.mxu0 %v291
        %1161 = vmatprep.subr.mxu0 0.0
        %1162 = vmatpush1.msra.mxu0 %v290
        %1163 = vmatprep.subr.mxu0 0.0
        %1164 = vmatpush1.msra.mxu0 %v289
        %1165 = vmatprep.subr.mxu0 0.0
        %1166 = vmatpush1.msra.mxu0 %v288
        %1167 = vmatprep.subr.mxu0 0.0
        %1168 = vmatpush1.msra.mxu0 %v287
        %1169 = vmatprep.subr.mxu0 0.0
        %1170 = vmatpush1.msra.mxu0 %v286
        %1171 = vmatprep.subr.mxu0 0.0
        %1172 = vmatpush2.msra.mxu0 0.0
        %1173 = vmatprep.subr.mxu0 0.0
        %1174 = vmatpush2.msra.mxu0 0.0
        %1175 = vmatprep.subr.mxu0 0.0
        %1176 = vmatpush2.msra.mxu0 0.0
        %1177 = vmatprep.subr.mxu0 0.0
        %1178 = vmatpush2.msra.mxu0 0.0
        %1179 = vmatprep.subr.mxu0 0.0
        %1180 = vmatpush2.msra.mxu0 0.0
        %1181 = vmatprep.subr.mxu0 0.0
        %1182 = vmatpush2.msra.mxu0 0.0
        %1183 = vmatprep.subr.mxu0 0.0
        %1184 = vmatpush2.msra.mxu0 0.0
        %1185 = vmatprep.subr.mxu0 0.0
        %1186 = vmatpush2.msra.mxu0 0.0
        %1187 = vmatprep.subr.mxu0 0.0
        %1188 = vmatpush2.msra.mxu0 0.0
        %1189 = vmatprep.subr.mxu0 0.0
        %1190 = vmatpush2.msra.mxu0 0.0
        %1191 = vmatprep.subr.mxu0 0.0
        %1192 = vmatpush2.msra.mxu0 0.0
        %1193 = vmatprep.subr.mxu0 0.0
        %1194 = vmatpush2.msra.mxu0 0.0
        %1195 = vmatprep.subr.mxu0 0.0
        %1196 = vmatpush2.msra.mxu0 0.0
        %1197 = vmatprep.subr.mxu0 0.0
        %1198 = vmatpush2.msra.mxu0 0.0
        %1199 = vmatprep.subr.mxu0 0.0
        %1200 = vmatpush2.msra.mxu0 0.0
        %1201 = vmatprep.subr.mxu0 0.0
        %1202 = vmatpush2.msra.mxu0 0.0
        %1203 = vmatprep.mubr.f32.mxu0 0.0
        %1204 = vmatmul.mubr.f32.gmra.mxu0 %v1131
        %v1205 = vpop.f32.mrf.mxu0
        %v1206 = vadd.f32 0.0, %v1205
        %v1207 = vpop.f32.mrf.mxu0
        %1208 = vmatprep.mubr.f32.mxu0 0.0
        %1209 = vmatmul.mubr.f32.gmra.mxu0 %v1132
        %v1210 = vpop.f32.mrf.mxu0
        %v1211 = vadd.f32 0.0, %v1210
        %v1212 = vpop.f32.mrf.mxu0
        %1213 = vmatprep.mubr.f32.mxu0 0.0
        %1214 = vmatmul.mubr.f32.gmra.mxu0 %v1133
        %v1215 = vpop.f32.mrf.mxu0
        %v1216 = vadd.f32 0.0, %v1215
        %v1217 = vpop.f32.mrf.mxu0
        %1218 = vmatprep.mubr.f32.mxu0 0.0
        %1219 = vmatmul.mubr.f32.gmra.mxu0 %v1134
        %v1220 = vpop.f32.mrf.mxu0
        %v1221 = vadd.f32 0.0, %v1220
        %v1222 = vpop.f32.mrf.mxu0
        %1223 = vmatprep.mubr.f32.mxu0 0.0
        %1224 = vmatmul.mubr.f32.gmra.mxu0 %v1135
        %v1225 = vpop.f32.mrf.mxu0
        %v1226 = vadd.f32 0.0, %v1225
        %v1227 = vpop.f32.mrf.mxu0
        %1228 = vmatprep.mubr.f32.mxu0 0.0
        %1229 = vmatmul.mubr.f32.gmra.mxu0 %v1136
        %v1230 = vpop.f32.mrf.mxu0
        %v1231 = vadd.f32 0.0, %v1230
        %v1232 = vpop.f32.mrf.mxu0
        %1233 = vmatprep.mubr.f32.mxu0 0.0
        %1234 = vmatmul.mubr.f32.gmra.mxu0 %v1137
        %v1235 = vpop.f32.mrf.mxu0
        %v1236 = vadd.f32 0.0, %v1235
        %v1237 = vpop.f32.mrf.mxu0
        %1238 = vmatprep.mubr.f32.mxu0 0.0
        %1239 = vmatmul.mubr.f32.gmra.mxu0 %v1138
        %v1240 = vpop.f32.mrf.mxu0
        %v1241 = vadd.f32 0.0, %v1240
        %v1242 = vpop.f32.mrf.mxu0
        %1243 = vdwg.mxu0
        %v1244 = vadd.f32 %v915, %v1206
        %v1245 = vadd.f32 %v920, %v1211
        %v1246 = vadd.f32 %v925, %v1216
        %v1247 = vadd.f32 %v930, %v1221
        %v1248 = vadd.f32 %v935, %v1226
        %v1249 = vadd.f32 %v940, %v1231
        %v1250 = vadd.f32 %v945, %v1236
        %v1251 = vadd.f32 %v950, %v1241
        %1252 = vmax.xlane.f32.xlu0 %v1244
        %v1253 = vpop.xlane.xlu0 %1252
        %1254 = vmax.xlane.f32.xlu0 %v1245
        %v1255 = vpop.xlane.xlu0 %1254
        %1256 = vmax.xlane.f32.xlu0 %v1246
        %v1257 = vpop.xlane.xlu0 %1256
        %1258 = vmax.xlane.f32.xlu0 %v1247
        %v1259 = vpop.xlane.xlu0 %1258
        %1260 = vmax.xlane.f32.xlu0 %v1248
        %v1261 = vpop.xlane.xlu0 %1260
        %1262 = vmax.xlane.f32.xlu0 %v1249
        %v1263 = vpop.xlane.xlu0 %1262
        %1264 = vmax.xlane.f32.xlu0 %v1250
        %v1265 = vpop.xlane.xlu0 %1264
        %1266 = vmax.xlane.f32.xlu0 %v1251
        %v1267 = vpop.xlane.xlu0 %1266
        %v1268 = vsub.f32 %v1244, %v1253
        %v1269 = vsub.f32 %v1245, %v1255
        %v1270 = vsub.f32 %v1246, %v1257
        %v1271 = vsub.f32 %v1247, %v1259
        %v1272 = vsub.f32 %v1248, %v1261
        %v1273 = vsub.f32 %v1249, %v1263
        %v1274 = vsub.f32 %v1250, %v1265
        %v1275 = vsub.f32 %v1251, %v1267
        %v1276 = vmul.f32 %v1268, 1.442695
        %v1277 = vpow.pop %v1276
        %v1278 = vmul.f32 %v1269, 1.442695
        %v1279 = vpow.pop %v1278
        %v1280 = vmul.f32 %v1270, 1.442695
        %v1281 = vpow.pop %v1280
        %v1282 = vmul.f32 %v1271, 1.442695
        %v1283 = vpow.pop %v1282
        %v1284 = vmul.f32 %v1272, 1.442695
        %v1285 = vpow.pop %v1284
        %v1286 = vmul.f32 %v1273, 1.442695
        %v1287 = vpow.pop %v1286
        %v1288 = vmul.f32 %v1274, 1.442695
        %v1289 = vpow.pop %v1288
        %v1290 = vmul.f32 %v1275, 1.442695
        %v1291 = vpow.pop %v1290
        %1292 = vadd.xlane.f32.xlu0 %v1277
        %v1293 = vpop.xlane.xlu0 %1292
        %1294 = vadd.xlane.f32.xlu0 %v1279
        %v1295 = vpop.xlane.xlu0 %1294
        %1296 = vadd.xlane.f32.xlu0 %v1281
        %v1297 = vpop.xlane.xlu0 %1296
        %1298 = vadd.xlane.f32.xlu0 %v1283
        %v1299 = vpop.xlane.xlu0 %1298
        %1300 = vadd.xlane.f32.xlu0 %v1285
        %v1301 = vpop.xlane.xlu0 %1300
        %1302 = vadd.xlane.f32.xlu0 %v1287
        %v1303 = vpop.xlane.xlu0 %1302
        %1304 = vadd.xlane.f32.xlu0 %v1289
        %v1305 = vpop.xlane.xlu0 %1304
        %1306 = vadd.xlane.f32.xlu0 %v1291
        %v1307 = vpop.xlane.xlu0 %1306
        %v1308 = vrcp.pop %v1293
        %v1309 = vrcp.pop %v1295
        %v1310 = vrcp.pop %v1297
        %v1311 = vrcp.pop %v1299
        %v1312 = vrcp.pop %v1301
        %v1313 = vrcp.pop %v1303
        %v1314 = vrcp.pop %v1305
        %v1315 = vrcp.pop %v1307
        %v1316 = vmul.f32 %v1308, 32.0
        %v1317 = vmul.f32 %v1309, 32.0
        %v1318 = vmul.f32 %v1310, 32.0
        %v1319 = vmul.f32 %v1311, 32.0
        %v1320 = vmul.f32 %v1312, 32.0
        %v1321 = vmul.f32 %v1313, 32.0
        %v1322 = vmul.f32 %v1314, 32.0
        %v1323 = vmul.f32 %v1315, 32.0
        %v1324 = vmul.f32 %v1277, %v1316
        %v1325 = vmul.f32 %v1279, %v1317
        %v1326 = vmul.f32 %v1281, %v1318
        %v1327 = vmul.f32 %v1283, %v1319
        %v1328 = vmul.f32 %v1285, %v1320
        %v1329 = vmul.f32 %v1287, %v1321
        %v1330 = vmul.f32 %v1289, %v1322
        %v1331 = vmul.f32 %v1291, %v1323
        %v1332 = vmul.f32 %v1324, %v353
        %v1333 = vmul.f32 %v1325, %v408
        %v1334 = vmul.f32 %v1326, %v463
        %v1335 = vmul.f32 %v1327, %v518
        %v1336 = vmul.f32 %v1328, %v573
        %v1337 = vmul.f32 %v1329, %v628
        %v1338 = vmul.f32 %v1330, %v683
        %v1339 = vmul.f32 %v1331, %v738
        %v1340 = vadd.f32 %v1332, %v1333
        %v1341 = vadd.f32 %v1340, %v1334
        %v1342 = vadd.f32 %v1341, %v1335
        %v1343 = vadd.f32 %v1342, %v1336
        %v1344 = vadd.f32 %v1343, %v1337
        %v1345 = vadd.f32 %v1344, %v1338
        %v1346 = vadd.f32 %v1345, %v1339
        %v1347 = vadd.f32 %v1346, %v747
        %v1348 = vmul.f32 %v1347, %v1347
        %1349 = vmatprep.subr.mxu0 0.0
        %1350 = vmatpush1.msra.mxu0 %v301
        %1351 = vmatprep.subr.mxu0 0.0
        %1352 = vmatpush1.msra.mxu0 %v300
        %1353 = vmatprep.subr.mxu0 0.0
        %1354 = vmatpush1.msra.mxu0 %v299
        %1355 = vmatprep.subr.mxu0 0.0
        %1356 = vmatpush1.msra.mxu0 %v298
        %1357 = vmatprep.subr.mxu0 0.0
        %1358 = vmatpush1.msra.mxu0 %v297
        %1359 = vmatprep.subr.mxu0 0.0
        %1360 = vmatpush1.msra.mxu0 %v296
        %1361 = vmatprep.subr.mxu0 0.0
        %1362 = vmatpush1.msra.mxu0 %v295
        %1363 = vmatprep.subr.mxu0 0.0
        %1364 = vmatpush1.msra.mxu0 %v294
        %1365 = vmatprep.subr.mxu0 0.0
        %1366 = vmatpush1.msra.mxu0 %v293
        %1367 = vmatprep.subr.mxu0 0.0
        %1368 = vmatpush1.msra.mxu0 %v292
        %1369 = vmatprep.subr.mxu0 0.0
        %1370 = vmatpush1.msra.mxu0 %v291
        %1371 = vmatprep.subr.mxu0 0.0
        %1372 = vmatpush1.msra.mxu0 %v290
        %1373 = vmatprep.subr.mxu0 0.0
        %1374 = vmatpush1.msra.mxu0 %v289
        %1375 = vmatprep.subr.mxu0 0.0
        %1376 = vmatpush1.msra.mxu0 %v288
        %1377 = vmatprep.subr.mxu0 0.0
        %1378 = vmatpush1.msra.mxu0 %v287
        %1379 = vmatprep.subr.mxu0 0.0
        %1380 = vmatpush1.msra.mxu0 %v286
        %1381 = vmatprep.subr.mxu0 0.0
        %1382 = vmatpush2.msra.mxu0 0.0
        %1383 = vmatprep.subr.mxu0 0.0
        %1384 = vmatpush2.msra.mxu0 0.0
        %1385 = vmatprep.subr.mxu0 0.0
        %1386 = vmatpush2.msra.mxu0 0.0
        %1387 = vmatprep.subr.mxu0 0.0
        %1388 = vmatpush2.msra.mxu0 0.0
        %1389 = vmatprep.subr.mxu0 0.0
        %1390 = vmatpush2.msra.mxu0 0.0
        %1391 = vmatprep.subr.mxu0 0.0
        %1392 = vmatpush2.msra.mxu0 0.0
        %1393 = vmatprep.subr.mxu0 0.0
        %1394 = vmatpush2.msra.mxu0 0.0
        %1395 = vmatprep.subr.mxu0 0.0
        %1396 = vmatpush2.msra.mxu0 0.0
        %1397 = vmatprep.subr.mxu0 0.0
        %1398 = vmatpush2.msra.mxu0 0.0
        %1399 = vmatprep.subr.mxu0 0.0
        %1400 = vmatpush2.msra.mxu0 0.0
        %1401 = vmatprep.subr.mxu0 0.0
        %1402 = vmatpush2.msra.mxu0 0.0
        %1403 = vmatprep.subr.mxu0 0.0
        %1404 = vmatpush2.msra.mxu0 0.0
        %1405 = vmatprep.subr.mxu0 0.0
        %1406 = vmatpush2.msra.mxu0 0.0
        %1407 = vmatprep.subr.mxu0 0.0
        %1408 = vmatpush2.msra.mxu0 0.0
        %1409 = vmatprep.subr.mxu0 0.0
        %1410 = vmatpush2.msra.mxu0 0.0
        %1411 = vmatprep.subr.mxu0 0.0
        %1412 = vmatpush2.msra.mxu0 0.0
        %1413 = vmatprep.mubr.f32.mxu0 0.0
        %1414 = vmatmul.mubr.f32.gmra.mxu0 %v1348
        %v1415 = vpop.f32.mrf.mxu0
        %v1416 = vadd.f32 0.0, %v1415
        %v1417 = vpop.f32.mrf.mxu0
        %1418 = vdwg.mxu0
        %v1419 = vrsqrt.pop %v1416
        %v1420 = vmul.f32 %v1416, %v1419
        %vm1421 = vcmp.eq.f32.partialorder %v1416, inf
        %v1422 = vsel %vm1421, %v1416, %v1420
        %vm1423 = vcmp.eq.f32.partialorder %v1416, 0.0
        %v1424 = vand.u32 %v1416, 2147483648
        %v1425 = vsel %vm1423, %v1424, %v1422
        %v1426 = vadd.f32 %v1416, 1.0
        %v1427 = vrcp.pop %v1426
        %v1428 = vmul.f32 %v1425, %v1427
        %v1429 = vmul.f32 %v1347, %v1428
        %1430 = vst [vmem:[%s243] sm:$0xff] %v1429
        %s1431 = sand.u32 %s119, 1
        %s1432 = scalar_lea.sflag [#allocation4], %s1431
        %s1433 = sand.u32 %s119, 1
        %s1434 = smul.addr %s1433, 8
        %s1435 = scalar_lea.vmem [#allocation8], %s1434
        // Predicated region
        $region49: #{tpu_custom_call.1} parent=35 // pred_check
          %p1436 = pneg %p129
        $region50: #{tpu_custom_call.1} parent=35 // pred_check_branch
          %1438 = sbr.rel (%p1436) target = $region52
        $region51: #{tpu_custom_call.1} parent=35 // pred_region
          %s1440 = ssub.s32 128, 128
          %1441 = vsyncadd %s1432, %s1440
          %s1442 = smul.addr %s22, 128
          %s1443 = scalar_lea.hbm %s4, %s1442
          %s1445 = sshll.u32 %s1435, 4
          %s1446 = int_to_ptr.vmem [resolvable:$true] %s1445
          %1448 = dma.vmem_to_hbm [thread:$0]  %s1446, 128, %s1443, %s1432
        $region52: #{tpu_custom_call.1} parent=35 // pred_fallthru
          _
      $region36: #{tpu_custom_call.1} parent=5 // pred_fallthru
        _
      %p1449 = scmp.le.s32.totalorder 2, %s17
      // Predicated region
      $region53: #{tpu_custom_call.1} parent=5 // pred_check
        %p1450 = pneg %p1449
      $region54: #{tpu_custom_call.1} parent=5 // pred_check_branch
        %1452 = sbr.rel (%p1450) target = $region56
      $region55: #{tpu_custom_call.1} parent=5 // pred_region
        %s1453 = ssub.s32 %s17, 2
        // Predicated region
        $region57: #{tpu_custom_call.1} parent=55 // pred_check
          %p1454 = pneg %p135
        $region58: #{tpu_custom_call.1} parent=55 // pred_check_branch
          %1456 = sbr.rel (%p1454) target = $region60
        $region59: #{tpu_custom_call.1} parent=55 // pred_region
          %s1457 = sand.u32 %s120, 1
          %s1458 = scalar_lea.sflag [#allocation4], %s1457
          %s1459 = sand.u32 %s120, 1
          %s1460 = smul.addr %s1459, 8
          %s1461 = scalar_lea.vmem [#allocation8], %s1460
          %1462 = dma.done %s1458, 128
        $region60: #{tpu_custom_call.1} parent=55 // pred_fallthru
          _
      $region56: #{tpu_custom_call.1} parent=5 // pred_fallthru
        _
    $region6: #{tpu_custom_call.1} parent=1 // loop_footer
      %s21 = sadd.s32 1, %s17
    $region7: #{tpu_custom_call.1} parent=1 // loop_footer_branch
      %16 = sbr.rel target = $region3
    $region8: #{tpu_custom_call.1} parent=1 // loop_exit
      _
    %1463 = vsyncpa [#allocation3], 1
    %s1464 = scalar_lea.sflag [#allocation3], 1
    %1465 = vsyncpa %s1464, 1
    %1466 = vsyncpa [#allocation6], 1
    %1467 = vsyncpa [#allocation4], 1
    %s1468 = scalar_lea.sflag [#allocation4], 1
    %1469 = vsyncpa %s1468, 1

</llo_original>
